<compile_context>
chip_gen: v7x
topology: tpu7x:2x2x1
jax: 0.10.0
libtpu: 0.0.40
codegen_flags: <defaults>
</compile_context>

<pallas_src>
import jax
import jax.numpy as jnp
from jax.experimental import pallas as pl
from jax.experimental.pallas import tpu as pltpu

EPS = 1e-5


def make_basic_block_kernel(B, H, W, Cin, Cout):
    """Kernel factory (shapes closed over statically).

    Layout: activations are lane-dense 2-D slabs, rows=(b,h), lanes=(w,c).
    A 3x3 conv is computed as 3 matmuls (one per kernel row kh) against a
    block-banded weight, so no im2col gather / patch scratch is needed.
    """
    assert W & (W - 1) == 0, "lane-roll BN reduction assumes W is a power of 2"
    Hp, Wp = H + 2, W + 2
    WCo = W * Cout
    inv_n = 1.0 / float(B * H * W)
    bf16, f32 = jnp.bfloat16, jnp.float32

    def kernel(x_ref, w1_ref, w2_ref, bn_ref, out_ref, pad_ref):

        def channel_total(v):
            # v: (1, W*Cout).  Cyclic lane rolls sum the W groups of Cout
            # lanes; the per-channel total ends up replicated in every group,
            # so no lane<->sublane reshape and no broadcast-back is needed.
            r = v
            sh = Cout
            while sh < WCo:
                r = r + pltpu.roll(r, shift=sh, axis=1)
                sh *= 2
            return r

        def bn(z, g_row, b_row, relu):
            # Training-mode BatchNorm (biased variance) over (b, h, w); fused
            # scale/shift (+ optional ReLU) applied to the live f32 value.
            mean = channel_total(jnp.sum(z, axis=0, keepdims=True)) * inv_n
            ex2 = channel_total(jnp.sum(z * z, axis=0, keepdims=True)) * inv_n
            var = jnp.maximum(ex2 - mean * mean, 0.0)   # clamp f32 cancellation
            scale = bn_ref[g_row:g_row + 1, :] * jax.lax.rsqrt(var + EPS)
            shift = bn_ref[b_row:b_row + 1, :] - mean * scale
            y = z * scale + shift
            return jnp.maximum(y, 0.0) if relu else y

        def conv(k_lanes, w_ref):
            # 3x3 conv = 3 MXU matmuls (one per kh) of the kh-shifted padded
            # rows against the block-banded weight; f32 accumulation.
            acc = None
            for kh in range(3):
                lhs = jnp.concatenate(
                    [pad_ref[b, kh:kh + H, :k_lanes] for b in range(B)], axis=0)
                part = jnp.dot(lhs, w_ref[kh], preferred_element_type=f32)
                acc = part if acc is None else acc + part
            return acc

        # One contiguous fill zeroes every pad border at once (small bf16 scratch).
        pad_ref[...] = jnp.zeros_like(pad_ref)

        # ---- conv1 + fused 1x1 shortcut: x written (bf16, lane-dense) once ----
        pad_ref[:, 1:H + 1, Cin:Cin + W * Cin] = x_ref[...].astype(bf16)
        z = conv(Wp * Cin, w1_ref)                  # (B*H, 2*W*Cout) f32
        y1 = bn(z[:, :WCo], 0, 1, relu=True)        # conv1 -> bn1 -> relu
        xd = bn(z[:, WCo:], 4, 5, relu=False)       # 1x1 shortcut -> bn_d

        # ---- conv2 reuses the same pad scratch at channel stride Cout; only
        #      the small left-pad strip still holding conv1 data is re-zeroed ----
        pad_ref[:, 1:H + 1, 0:Cout] = jnp.zeros((B, H, Cout), bf16)
        for b in range(B):
            pad_ref[b, 1:H + 1, Cout:Cout + WCo] = (
                y1[b * H:(b + 1) * H, :].astype(bf16))
        y2 = bn(conv(Wp * Cout, w2_ref), 2, 3, relu=False)

        # ---- residual add + final ReLU; full-lane (B*H, W*Cout) store ----
        out_ref[...] = jnp.maximum(xd + y2, 0.0)

    return kernel


def basic_block_forward(x_nchw, params):
    """x_nchw: (B, Cin, H, W) float32. Returns (B, Cout, H, W) float32."""
    B, Cin, H, W = x_nchw.shape
    Cout = params["w1"].shape[0]
    Hp, Wp = H + 2, W + 2
    Cmax = max(Cin, Cout)

    # Lane-dense input slab: rows (b, h), lanes (w, c).
    # TODO(synk): keeping the surrounding model NHWC (or folding this transpose
    #             into a gridded index_map) would remove the two standalone
    #             HBM transposes around the kernel.
    x = jnp.transpose(x_nchw, (0, 2, 3, 1)).astype(jnp.float32)
    x = x.reshape(B, H, W * Cin)

    # Block-banded conv weights:
    #   band[kh][w'*Ci + c, w*Co + co] = w[co, c, kh, w'-w] for 0 <= w'-w <= 2.
    # S[w', w, kw] = 1 iff w' == w + kw.
    S = (jnp.arange(Wp)[:, None, None]
         == jnp.arange(W)[None, :, None] + jnp.arange(3)[None, None, :]
         ).astype(jnp.float32)

    def banded(w_oihw):
        Co, Ci = w_oihw.shape[:2]
        wt = jnp.transpose(w_oihw, (2, 3, 1, 0))          # (kh, kw, Ci, Co)
        bw = jnp.einsum("pwk,hkcd->hpcwd", S, wt)         # (3, Wp, Ci, W, Co)
        return bw.reshape(3, Wp * Ci, W * Co)

    bw1 = banded(params["w1"])                            # (3, Wp*Cin, W*Cout)
    bw2 = banded(params["w2"])                            # (3, Wp*Cout, W*Cout)

    # 1x1 projection shortcut folded into the center row (kh=1) of conv1's
    # weight as a second output-column block -> x is matmul'ed only once.
    wd_t = params["wd"][:, :, 0, 0].T                     # (Cin, Cout)
    sc1 = jnp.einsum("pw,cd->pcwd", S[:, :, 1], wd_t).reshape(Wp * Cin, W * Cout)
    sc = jnp.stack([jnp.zeros_like(sc1), sc1, jnp.zeros_like(sc1)])
    w1f = jnp.concatenate([bw1, sc], axis=-1).astype(jnp.bfloat16)   # (3,Wp*Cin,2*W*Cout)
    w2f = bw2.astype(jnp.bfloat16)                                   # (3,Wp*Cout,W*Cout)

    # All six BN parameter vectors packed into one (6, W*Cout) input, pre-tiled
    # to the lane layout (lane = w*Cout + co).
    bn = jnp.stack([jnp.tile(params[k].astype(jnp.float32), W)
                    for k in ("g1", "b1", "g2", "b2", "gd", "bd")])

    vmem = pl.BlockSpec(memory_space=pltpu.MemorySpace.VMEM)
    out2d = pl.pallas_call(
        make_basic_block_kernel(B, H, W, Cin, Cout),
        out_shape=jax.ShapeDtypeStruct((B * H, W * Cout), jnp.float32),
        in_specs=[vmem] * 4,
        out_specs=vmem,
        scratch_shapes=[pltpu.VMEM((B, Hp, Wp * Cmax), jnp.bfloat16)],  # shared pad
        compiler_params=pltpu.CompilerParams(vmem_limit_bytes=32 * 1024 * 1024),
    )(x, w1f, w2f, bn)

    out = out2d.reshape(B, H, W, Cout)
    return jnp.transpose(out, (0, 3, 1, 2))               # back to NCHW


def reference_forward(x_nchw, params):
    """Pure-JAX (XLA conv) reference; matmul operands quantized to bf16 the
    same way as the kernel (f32 accumulation), so the comparison isolates
    implementation bugs rather than MXU precision."""
    x = jnp.transpose(x_nchw, (0, 2, 3, 1)).astype(jnp.float32)

    def conv(z, w_oihw, k):
        w_hwio = jnp.transpose(w_oihw, (2, 3, 1, 0)).astype(jnp.bfloat16)
        pad = [(k // 2, k // 2)] * 2
        return jax.lax.conv_general_dilated(
            z.astype(jnp.bfloat16), w_hwio, (1, 1), pad,
            dimension_numbers=("NHWC", "HWIO", "NHWC"),
            preferred_element_type=jnp.float32)

    def bn(z, g, b):
        mean = jnp.mean(z, axis=(0, 1, 2), keepdims=True)
        var = jnp.mean(jnp.square(z - mean), axis=(0, 1, 2), keepdims=True)
        return (z - mean) * jax.lax.rsqrt(var + EPS) * g + b

    y = jax.nn.relu(bn(conv(x, params["w1"], 3), params["g1"], params["b1"]))
    y = bn(conv(y, params["w2"], 3), params["g2"], params["b2"])
    xd = bn(conv(x, params["wd"], 1), params["gd"], params["bd"])
    out = jax.nn.relu(xd + y)
    return jnp.transpose(out, (0, 3, 1, 2))


if __name__ == "__main__":
    B, Cin, Cout, H, W = 2, 4, 8, 16, 16   # c_in != c_out -> projection shortcut

    key = jax.random.PRNGKey(0)
    k_x, k_w1, k_w2, k_wd = jax.random.split(key, 4)

    x = jax.random.normal(k_x, (B, Cin, H, W), dtype=jnp.float32)

    params = {
        "w1": 0.1 * jax.random.normal(k_w1, (Cout, Cin, 3, 3), jnp.float32),
        "w2": 0.1 * jax.random.normal(k_w2, (Cout, Cout, 3, 3), jnp.float32),
        "wd": 0.1 * jax.random.normal(k_wd, (Cout, Cin, 1, 1), jnp.float32),
        "g1": 1.0 + 0.05 * jnp.arange(Cout, dtype=jnp.float32),
        "b1": 0.02 * jnp.arange(Cout, dtype=jnp.float32),
        "g2": 1.0 - 0.03 * jnp.arange(Cout, dtype=jnp.float32),
        "b2": -0.01 * jnp.arange(Cout, dtype=jnp.float32),
        "gd": 1.0 + 0.01 * jnp.arange(Cout, dtype=jnp.float32),
        "bd": 0.015 * jnp.arange(Cout, dtype=jnp.float32),
    }

    out = jax.block_until_ready(basic_block_forward(x, params))
    ref = jax.block_until_ready(reference_forward(x, params))

    assert out.shape == (B, Cout, H, W), out.shape
    # Tolerance reflects bf16-operand MXU matmuls (identical quantization in
    # kernel and reference; residual diff is accumulation order + a bf16
    # round-off of the intermediate activation).
    assert jnp.allclose(out, ref, atol=1e-2, rtol=1e-2), (
        float(jnp.max(jnp.abs(out - ref))))

    print("KERNEL_OK")
</pallas_src>

<mosaic_0001>
module attributes {stable_mosaic.version = 11 : i64} {
  func.func @kernel(%arg0: memref<2x16x64xf32, #tpu.memory_space<vmem>>, %arg1: memref<3x72x256xbf16, #tpu.memory_space<vmem>>, %arg2: memref<3x144x128xbf16, #tpu.memory_space<vmem>>, %arg3: memref<6x128xf32, #tpu.memory_space<vmem>>, %arg4: memref<32x128xf32, #tpu.memory_space<vmem>>, %arg5: memref<2x18x144xbf16, #tpu.memory_space<vmem>>) attributes {dimension_semantics = [], scalar_prefetch = 0 : i64, scratch_operands = 1 : i64, tpu.core_type = #tpu.core_type<tc>} {
    %cst = arith.constant 0.000000e+00 : bf16
    %0 = vector.broadcast %cst : bf16 to vector<2x18x144xbf16>
    %c0 = arith.constant 0 : index
    %c0_0 = arith.constant 0 : index
    %c0_1 = arith.constant 0 : index
    %1 = vector.load %arg5[%c0, %c0_0, %c0_1] : memref<2x18x144xbf16, #tpu.memory_space<vmem>>, vector<2x18x144xbf16>
    tpu.vector_store %arg5[%c0, %c0_0, %c0_1], %0 {strides = array<i32>} : memref<2x18x144xbf16, #tpu.memory_space<vmem>>, vector<2x18x144xbf16>,
    %c0_2 = arith.constant 0 : index
    %c0_3 = arith.constant 0 : index
    %c0_4 = arith.constant 0 : index
    %2 = vector.load %arg0[%c0_2, %c0_3, %c0_4] : memref<2x16x64xf32, #tpu.memory_space<vmem>>, vector<2x16x64xf32>
    %3 = arith.truncf %2 : vector<2x16x64xf32> to vector<2x16x64xbf16>
    %c0_5 = arith.constant 0 : index
    %c1 = arith.constant 1 : index
    %c4 = arith.constant 4 : index
    %4 = vector.load %arg5[%c0_5, %c1, %c4] : memref<2x18x144xbf16, #tpu.memory_space<vmem>>, vector<2x16x64xbf16>
    tpu.vector_store %arg5[%c0_5, %c1, %c4], %3 {strides = array<i32>} : memref<2x18x144xbf16, #tpu.memory_space<vmem>>, vector<2x16x64xbf16>,
    %c0_6 = arith.constant 0 : index
    %c0_7 = arith.constant 0 : index
    %c0_8 = arith.constant 0 : index
    %5 = vector.load %arg5[%c0_6, %c0_7, %c0_8] : memref<2x18x144xbf16, #tpu.memory_space<vmem>>, vector<1x16x72xbf16>
    %6 = vector.shape_cast %5 : vector<1x16x72xbf16> to vector<16x72xbf16>
    %c1_9 = arith.constant 1 : index
    %c0_10 = arith.constant 0 : index
    %c0_11 = arith.constant 0 : index
    %7 = vector.load %arg5[%c1_9, %c0_10, %c0_11] : memref<2x18x144xbf16, #tpu.memory_space<vmem>>, vector<1x16x72xbf16>
    %8 = vector.shape_cast %7 : vector<1x16x72xbf16> to vector<16x72xbf16>
    %9 = tpu.concatenate %6, %8 in 0 : vector<16x72xbf16>, vector<16x72xbf16> -> vector<32x72xbf16>
    %c0_12 = arith.constant 0 : index
    %c0_13 = arith.constant 0 : index
    %c0_14 = arith.constant 0 : index
    %10 = vector.load %arg1[%c0_12, %c0_13, %c0_14] : memref<3x72x256xbf16, #tpu.memory_space<vmem>>, vector<1x72x256xbf16>
    %11 = vector.shape_cast %10 : vector<1x72x256xbf16> to vector<72x256xbf16>
    %cst_15 = arith.constant dense<0.000000e+00> : vector<32x256xf32>
    %12 = tpu.matmul %9, %11, %cst_15 {dimension_numbers = #tpu.dot_dimension_numbers<[1], [0], [0], [1], [0, 0, 1, 1], [], []>} : vector<32x72xbf16>, vector<72x256xbf16>, vector<32x256xf32> -> vector<32x256xf32>
    %c0_16 = arith.constant 0 : index
    %c1_17 = arith.constant 1 : index
    %c0_18 = arith.constant 0 : index
    %13 = vector.load %arg5[%c0_16, %c1_17, %c0_18] : memref<2x18x144xbf16, #tpu.memory_space<vmem>>, vector<1x16x72xbf16>
    %14 = vector.shape_cast %13 : vector<1x16x72xbf16> to vector<16x72xbf16>
    %c1_19 = arith.constant 1 : index
    %c1_20 = arith.constant 1 : index
    %c0_21 = arith.constant 0 : index
    %15 = vector.load %arg5[%c1_19, %c1_20, %c0_21] : memref<2x18x144xbf16, #tpu.memory_space<vmem>>, vector<1x16x72xbf16>
    %16 = vector.shape_cast %15 : vector<1x16x72xbf16> to vector<16x72xbf16>
    %17 = tpu.concatenate %14, %16 in 0 : vector<16x72xbf16>, vector<16x72xbf16> -> vector<32x72xbf16>
    %c1_22 = arith.constant 1 : index
    %c0_23 = arith.constant 0 : index
    %c0_24 = arith.constant 0 : index
    %18 = vector.load %arg1[%c1_22, %c0_23, %c0_24] : memref<3x72x256xbf16, #tpu.memory_space<vmem>>, vector<1x72x256xbf16>
    %19 = vector.shape_cast %18 : vector<1x72x256xbf16> to vector<72x256xbf16>
    %cst_25 = arith.constant dense<0.000000e+00> : vector<32x256xf32>
    %20 = tpu.matmul %17, %19, %cst_25 {dimension_numbers = #tpu.dot_dimension_numbers<[1], [0], [0], [1], [0, 0, 1, 1], [], []>} : vector<32x72xbf16>, vector<72x256xbf16>, vector<32x256xf32> -> vector<32x256xf32>
    %21 = arith.addf %12, %20 : vector<32x256xf32>
    %c0_26 = arith.constant 0 : index
    %c2 = arith.constant 2 : index
    %c0_27 = arith.constant 0 : index
    %22 = vector.load %arg5[%c0_26, %c2, %c0_27] : memref<2x18x144xbf16, #tpu.memory_space<vmem>>, vector<1x16x72xbf16>
    %23 = vector.shape_cast %22 : vector<1x16x72xbf16> to vector<16x72xbf16>
    %c1_28 = arith.constant 1 : index
    %c2_29 = arith.constant 2 : index
    %c0_30 = arith.constant 0 : index
    %24 = vector.load %arg5[%c1_28, %c2_29, %c0_30] : memref<2x18x144xbf16, #tpu.memory_space<vmem>>, vector<1x16x72xbf16>
    %25 = vector.shape_cast %24 : vector<1x16x72xbf16> to vector<16x72xbf16>
    %26 = tpu.concatenate %23, %25 in 0 : vector<16x72xbf16>, vector<16x72xbf16> -> vector<32x72xbf16>
    %c2_31 = arith.constant 2 : index
    %c0_32 = arith.constant 0 : index
    %c0_33 = arith.constant 0 : index
    %27 = vector.load %arg1[%c2_31, %c0_32, %c0_33] : memref<3x72x256xbf16, #tpu.memory_space<vmem>>, vector<1x72x256xbf16>
    %28 = vector.shape_cast %27 : vector<1x72x256xbf16> to vector<72x256xbf16>
    %cst_34 = arith.constant dense<0.000000e+00> : vector<32x256xf32>
    %29 = tpu.matmul %26, %28, %cst_34 {dimension_numbers = #tpu.dot_dimension_numbers<[1], [0], [0], [1], [0, 0, 1, 1], [], []>} : vector<32x72xbf16>, vector<72x256xbf16>, vector<32x256xf32> -> vector<32x256xf32>
    %30 = arith.addf %21, %29 : vector<32x256xf32>
    %31 = vector.extract_strided_slice %30 {offsets = [0, 0], sizes = [32, 128], strides = [1, 1]} : vector<32x256xf32> to vector<32x128xf32>
    %cst_35 = arith.constant dense<0.000000e+00> : vector<128xf32>
    %32 = vector.multi_reduction <add>, %31, %cst_35 [0] : vector<32x128xf32> to vector<128xf32>
    %33 = vector.shape_cast %32 : vector<128xf32> to vector<1x128xf32>
    %c8_i32 = arith.constant 8 : i32
    %34 = tpu.dynamic_rotate %33 by %c8_i32 dim 1 : vector<1x128xf32>, i32 -> vector<1x128xf32>
    %35 = arith.addf %33, %34 : vector<1x128xf32>
    %c16_i32 = arith.constant 16 : i32
    %36 = tpu.dynamic_rotate %35 by %c16_i32 dim 1 : vector<1x128xf32>, i32 -> vector<1x128xf32>
    %37 = arith.addf %35, %36 : vector<1x128xf32>
    %c32_i32 = arith.constant 32 : i32
    %38 = tpu.dynamic_rotate %37 by %c32_i32 dim 1 : vector<1x128xf32>, i32 -> vector<1x128xf32>
    %39 = arith.addf %37, %38 : vector<1x128xf32>
    %c64_i32 = arith.constant 64 : i32
    %40 = tpu.dynamic_rotate %39 by %c64_i32 dim 1 : vector<1x128xf32>, i32 -> vector<1x128xf32>
    %41 = arith.addf %39, %40 : vector<1x128xf32>
    %cst_36 = arith.constant 0.001953125 : f32
    %42 = vector.broadcast %cst_36 : f32 to vector<1x128xf32>
    %43 = arith.mulf %41, %42 : vector<1x128xf32>
    %44 = arith.mulf %31, %31 : vector<32x128xf32>
    %cst_37 = arith.constant dense<0.000000e+00> : vector<128xf32>
    %45 = vector.multi_reduction <add>, %44, %cst_37 [0] : vector<32x128xf32> to vector<128xf32>
    %46 = vector.shape_cast %45 : vector<128xf32> to vector<1x128xf32>
    %c8_i32_38 = arith.constant 8 : i32
    %47 = tpu.dynamic_rotate %46 by %c8_i32_38 dim 1 : vector<1x128xf32>, i32 -> vector<1x128xf32>
    %48 = arith.addf %46, %47 : vector<1x128xf32>
    %c16_i32_39 = arith.constant 16 : i32
    %49 = tpu.dynamic_rotate %48 by %c16_i32_39 dim 1 : vector<1x128xf32>, i32 -> vector<1x128xf32>
    %50 = arith.addf %48, %49 : vector<1x128xf32>
    %c32_i32_40 = arith.constant 32 : i32
    %51 = tpu.dynamic_rotate %50 by %c32_i32_40 dim 1 : vector<1x128xf32>, i32 -> vector<1x128xf32>
    %52 = arith.addf %50, %51 : vector<1x128xf32>
    %c64_i32_41 = arith.constant 64 : i32
    %53 = tpu.dynamic_rotate %52 by %c64_i32_41 dim 1 : vector<1x128xf32>, i32 -> vector<1x128xf32>
    %54 = arith.addf %52, %53 : vector<1x128xf32>
    %cst_42 = arith.constant 0.001953125 : f32
    %55 = vector.broadcast %cst_42 : f32 to vector<1x128xf32>
    %56 = arith.mulf %54, %55 : vector<1x128xf32>
    %57 = arith.mulf %43, %43 : vector<1x128xf32>
    %58 = arith.subf %56, %57 : vector<1x128xf32>
    %cst_43 = arith.constant 0.000000e+00 : f32
    %59 = vector.broadcast %cst_43 : f32 to vector<1x128xf32>
    %60 = arith.maximumf %58, %59 : vector<1x128xf32>
    %c0_44 = arith.constant 0 : index
    %c0_45 = arith.constant 0 : index
    %61 = vector.load %arg3[%c0_44, %c0_45] : memref<6x128xf32, #tpu.memory_space<vmem>>, vector<1x128xf32>
    %cst_46 = arith.constant 9.99999974E-6 : f32
    %62 = vector.broadcast %cst_46 : f32 to vector<1x128xf32>
    %63 = arith.addf %60, %62 : vector<1x128xf32>
    %64 = math.rsqrt %63 : vector<1x128xf32>
    %65 = arith.mulf %61, %64 : vector<1x128xf32>
    %c1_47 = arith.constant 1 : index
    %c0_48 = arith.constant 0 : index
    %66 = vector.load %arg3[%c1_47, %c0_48] : memref<6x128xf32, #tpu.memory_space<vmem>>, vector<1x128xf32>
    %67 = arith.mulf %43, %65 : vector<1x128xf32>
    %68 = arith.subf %66, %67 : vector<1x128xf32>
    %69 = vector.broadcast %65 : vector<1x128xf32> to vector<32x128xf32>
    %70 = arith.mulf %31, %69 : vector<32x128xf32>
    %71 = vector.broadcast %68 : vector<1x128xf32> to vector<32x128xf32>
    %72 = arith.addf %70, %71 : vector<32x128xf32>
    %cst_49 = arith.constant 0.000000e+00 : f32
    %73 = vector.broadcast %cst_49 : f32 to vector<32x128xf32>
    %74 = arith.maximumf %72, %73 : vector<32x128xf32>
    %75 = vector.extract_strided_slice %30 {offsets = [0, 128], sizes = [32, 128], strides = [1, 1]} : vector<32x256xf32> to vector<32x128xf32>
    %cst_50 = arith.constant dense<0.000000e+00> : vector<128xf32>
    %76 = vector.multi_reduction <add>, %75, %cst_50 [0] : vector<32x128xf32> to vector<128xf32>
    %77 = vector.shape_cast %76 : vector<128xf32> to vector<1x128xf32>
    %c8_i32_51 = arith.constant 8 : i32
    %78 = tpu.dynamic_rotate %77 by %c8_i32_51 dim 1 : vector<1x128xf32>, i32 -> vector<1x128xf32>
    %79 = arith.addf %77, %78 : vector<1x128xf32>
    %c16_i32_52 = arith.constant 16 : i32
    %80 = tpu.dynamic_rotate %79 by %c16_i32_52 dim 1 : vector<1x128xf32>, i32 -> vector<1x128xf32>
    %81 = arith.addf %79, %80 : vector<1x128xf32>
    %c32_i32_53 = arith.constant 32 : i32
    %82 = tpu.dynamic_rotate %81 by %c32_i32_53 dim 1 : vector<1x128xf32>, i32 -> vector<1x128xf32>
    %83 = arith.addf %81, %82 : vector<1x128xf32>
    %c64_i32_54 = arith.constant 64 : i32
    %84 = tpu.dynamic_rotate %83 by %c64_i32_54 dim 1 : vector<1x128xf32>, i32 -> vector<1x128xf32>
    %85 = arith.addf %83, %84 : vector<1x128xf32>
    %cst_55 = arith.constant 0.001953125 : f32
    %86 = vector.broadcast %cst_55 : f32 to vector<1x128xf32>
    %87 = arith.mulf %85, %86 : vector<1x128xf32>
    %88 = arith.mulf %75, %75 : vector<32x128xf32>
    %cst_56 = arith.constant dense<0.000000e+00> : vector<128xf32>
    %89 = vector.multi_reduction <add>, %88, %cst_56 [0] : vector<32x128xf32> to vector<128xf32>
    %90 = vector.shape_cast %89 : vector<128xf32> to vector<1x128xf32>
    %c8_i32_57 = arith.constant 8 : i32
    %91 = tpu.dynamic_rotate %90 by %c8_i32_57 dim 1 : vector<1x128xf32>, i32 -> vector<1x128xf32>
    %92 = arith.addf %90, %91 : vector<1x128xf32>
    %c16_i32_58 = arith.constant 16 : i32
    %93 = tpu.dynamic_rotate %92 by %c16_i32_58 dim 1 : vector<1x128xf32>, i32 -> vector<1x128xf32>
    %94 = arith.addf %92, %93 : vector<1x128xf32>
    %c32_i32_59 = arith.constant 32 : i32
    %95 = tpu.dynamic_rotate %94 by %c32_i32_59 dim 1 : vector<1x128xf32>, i32 -> vector<1x128xf32>
    %96 = arith.addf %94, %95 : vector<1x128xf32>
    %c64_i32_60 = arith.constant 64 : i32
    %97 = tpu.dynamic_rotate %96 by %c64_i32_60 dim 1 : vector<1x128xf32>, i32 -> vector<1x128xf32>
    %98 = arith.addf %96, %97 : vector<1x128xf32>
    %cst_61 = arith.constant 0.001953125 : f32
    %99 = vector.broadcast %cst_61 : f32 to vector<1x128xf32>
    %100 = arith.mulf %98, %99 : vector<1x128xf32>
    %101 = arith.mulf %87, %87 : vector<1x128xf32>
    %102 = arith.subf %100, %101 : vector<1x128xf32>
    %cst_62 = arith.constant 0.000000e+00 : f32
    %103 = vector.broadcast %cst_62 : f32 to vector<1x128xf32>
    %104 = arith.maximumf %102, %103 : vector<1x128xf32>
    %c4_63 = arith.constant 4 : index
    %c0_64 = arith.constant 0 : index
    %105 = vector.load %arg3[%c4_63, %c0_64] : memref<6x128xf32, #tpu.memory_space<vmem>>, vector<1x128xf32>
    %cst_65 = arith.constant 9.99999974E-6 : f32
    %106 = vector.broadcast %cst_65 : f32 to vector<1x128xf32>
    %107 = arith.addf %104, %106 : vector<1x128xf32>
    %108 = math.rsqrt %107 : vector<1x128xf32>
    %109 = arith.mulf %105, %108 : vector<1x128xf32>
    %c5 = arith.constant 5 : index
    %c0_66 = arith.constant 0 : index
    %110 = vector.load %arg3[%c5, %c0_66] : memref<6x128xf32, #tpu.memory_space<vmem>>, vector<1x128xf32>
    %111 = arith.mulf %87, %109 : vector<1x128xf32>
    %112 = arith.subf %110, %111 : vector<1x128xf32>
    %113 = vector.broadcast %109 : vector<1x128xf32> to vector<32x128xf32>
    %114 = arith.mulf %75, %113 : vector<32x128xf32>
    %115 = vector.broadcast %112 : vector<1x128xf32> to vector<32x128xf32>
    %116 = arith.addf %114, %115 : vector<32x128xf32>
    %cst_67 = arith.constant 0.000000e+00 : bf16
    %117 = vector.broadcast %cst_67 : bf16 to vector<2x16x8xbf16>
    %c0_68 = arith.constant 0 : index
    %c1_69 = arith.constant 1 : index
    %c0_70 = arith.constant 0 : index
    %118 = vector.load %arg5[%c0_68, %c1_69, %c0_70] : memref<2x18x144xbf16, #tpu.memory_space<vmem>>, vector<2x16x8xbf16>
    tpu.vector_store %arg5[%c0_68, %c1_69, %c0_70], %117 {strides = array<i32>} : memref<2x18x144xbf16, #tpu.memory_space<vmem>>, vector<2x16x8xbf16>,
    %119 = vector.extract_strided_slice %74 {offsets = [0, 0], sizes = [16, 128], strides = [1, 1]} : vector<32x128xf32> to vector<16x128xf32>
    %120 = arith.truncf %119 : vector<16x128xf32> to vector<16x128xbf16>
    %c0_71 = arith.constant 0 : index
    %c1_72 = arith.constant 1 : index
    %c8 = arith.constant 8 : index
    %121 = vector.load %arg5[%c0_71, %c1_72, %c8] : memref<2x18x144xbf16, #tpu.memory_space<vmem>>, vector<1x16x128xbf16>
    %122 = vector.shape_cast %121 : vector<1x16x128xbf16> to vector<16x128xbf16>
    %123 = vector.shape_cast %120 : vector<16x128xbf16> to vector<1x16x128xbf16>
    tpu.vector_store %arg5[%c0_71, %c1_72, %c8], %123 {strides = array<i32>} : memref<2x18x144xbf16, #tpu.memory_space<vmem>>, vector<1x16x128xbf16>,
    %124 = vector.extract_strided_slice %74 {offsets = [16, 0], sizes = [16, 128], strides = [1, 1]} : vector<32x128xf32> to vector<16x128xf32>
    %125 = arith.truncf %124 : vector<16x128xf32> to vector<16x128xbf16>
    %c1_73 = arith.constant 1 : index
    %c1_74 = arith.constant 1 : index
    %c8_75 = arith.constant 8 : index
    %126 = vector.load %arg5[%c1_73, %c1_74, %c8_75] : memref<2x18x144xbf16, #tpu.memory_space<vmem>>, vector<1x16x128xbf16>
    %127 = vector.shape_cast %126 : vector<1x16x128xbf16> to vector<16x128xbf16>
    %128 = vector.shape_cast %125 : vector<16x128xbf16> to vector<1x16x128xbf16>
    tpu.vector_store %arg5[%c1_73, %c1_74, %c8_75], %128 {strides = array<i32>} : memref<2x18x144xbf16, #tpu.memory_space<vmem>>, vector<1x16x128xbf16>,
    %c0_76 = arith.constant 0 : index
    %c0_77 = arith.constant 0 : index
    %c0_78 = arith.constant 0 : index
    %129 = vector.load %arg5[%c0_76, %c0_77, %c0_78] : memref<2x18x144xbf16, #tpu.memory_space<vmem>>, vector<1x16x144xbf16>
    %130 = vector.shape_cast %129 : vector<1x16x144xbf16> to vector<16x144xbf16>
    %c1_79 = arith.constant 1 : index
    %c0_80 = arith.constant 0 : index
    %c0_81 = arith.constant 0 : index
    %131 = vector.load %arg5[%c1_79, %c0_80, %c0_81] : memref<2x18x144xbf16, #tpu.memory_space<vmem>>, vector<1x16x144xbf16>
    %132 = vector.shape_cast %131 : vector<1x16x144xbf16> to vector<16x144xbf16>
    %133 = tpu.concatenate %130, %132 in 0 : vector<16x144xbf16>, vector<16x144xbf16> -> vector<32x144xbf16>
    %c0_82 = arith.constant 0 : index
    %c0_83 = arith.constant 0 : index
    %c0_84 = arith.constant 0 : index
    %134 = vector.load %arg2[%c0_82, %c0_83, %c0_84] : memref<3x144x128xbf16, #tpu.memory_space<vmem>>, vector<1x144x128xbf16>
    %135 = vector.shape_cast %134 : vector<1x144x128xbf16> to vector<144x128xbf16>
    %cst_85 = arith.constant dense<0.000000e+00> : vector<32x128xf32>
    %136 = tpu.matmul %133, %135, %cst_85 {dimension_numbers = #tpu.dot_dimension_numbers<[1], [0], [0], [1], [0, 0, 1, 1], [], []>} : vector<32x144xbf16>, vector<144x128xbf16>, vector<32x128xf32> -> vector<32x128xf32>
    %c0_86 = arith.constant 0 : index
    %c1_87 = arith.constant 1 : index
    %c0_88 = arith.constant 0 : index
    %137 = vector.load %arg5[%c0_86, %c1_87, %c0_88] : memref<2x18x144xbf16, #tpu.memory_space<vmem>>, vector<1x16x144xbf16>
    %138 = vector.shape_cast %137 : vector<1x16x144xbf16> to vector<16x144xbf16>
    %c1_89 = arith.constant 1 : index
    %c1_90 = arith.constant 1 : index
    %c0_91 = arith.constant 0 : index
    %139 = vector.load %arg5[%c1_89, %c1_90, %c0_91] : memref<2x18x144xbf16, #tpu.memory_space<vmem>>, vector<1x16x144xbf16>
    %140 = vector.shape_cast %139 : vector<1x16x144xbf16> to vector<16x144xbf16>
    %141 = tpu.concatenate %138, %140 in 0 : vector<16x144xbf16>, vector<16x144xbf16> -> vector<32x144xbf16>
    %c1_92 = arith.constant 1 : index
    %c0_93 = arith.constant 0 : index
    %c0_94 = arith.constant 0 : index
    %142 = vector.load %arg2[%c1_92, %c0_93, %c0_94] : memref<3x144x128xbf16, #tpu.memory_space<vmem>>, vector<1x144x128xbf16>
    %143 = vector.shape_cast %142 : vector<1x144x128xbf16> to vector<144x128xbf16>
    %cst_95 = arith.constant dense<0.000000e+00> : vector<32x128xf32>
    %144 = tpu.matmul %141, %143, %cst_95 {dimension_numbers = #tpu.dot_dimension_numbers<[1], [0], [0], [1], [0, 0, 1, 1], [], []>} : vector<32x144xbf16>, vector<144x128xbf16>, vector<32x128xf32> -> vector<32x128xf32>
    %145 = arith.addf %136, %144 : vector<32x128xf32>
    %c0_96 = arith.constant 0 : index
    %c2_97 = arith.constant 2 : index
    %c0_98 = arith.constant 0 : index
    %146 = vector.load %arg5[%c0_96, %c2_97, %c0_98] : memref<2x18x144xbf16, #tpu.memory_space<vmem>>, vector<1x16x144xbf16>
    %147 = vector.shape_cast %146 : vector<1x16x144xbf16> to vector<16x144xbf16>
    %c1_99 = arith.constant 1 : index
    %c2_100 = arith.constant 2 : index
    %c0_101 = arith.constant 0 : index
    %148 = vector.load %arg5[%c1_99, %c2_100, %c0_101] : memref<2x18x144xbf16, #tpu.memory_space<vmem>>, vector<1x16x144xbf16>
    %149 = vector.shape_cast %148 : vector<1x16x144xbf16> to vector<16x144xbf16>
    %150 = tpu.concatenate %147, %149 in 0 : vector<16x144xbf16>, vector<16x144xbf16> -> vector<32x144xbf16>
    %c2_102 = arith.constant 2 : index
    %c0_103 = arith.constant 0 : index
    %c0_104 = arith.constant 0 : index
    %151 = vector.load %arg2[%c2_102, %c0_103, %c0_104] : memref<3x144x128xbf16, #tpu.memory_space<vmem>>, vector<1x144x128xbf16>
    %152 = vector.shape_cast %151 : vector<1x144x128xbf16> to vector<144x128xbf16>
    %cst_105 = arith.constant dense<0.000000e+00> : vector<32x128xf32>
    %153 = tpu.matmul %150, %152, %cst_105 {dimension_numbers = #tpu.dot_dimension_numbers<[1], [0], [0], [1], [0, 0, 1, 1], [], []>} : vector<32x144xbf16>, vector<144x128xbf16>, vector<32x128xf32> -> vector<32x128xf32>
    %154 = arith.addf %145, %153 : vector<32x128xf32>
    %cst_106 = arith.constant dense<0.000000e+00> : vector<128xf32>
    %155 = vector.multi_reduction <add>, %154, %cst_106 [0] : vector<32x128xf32> to vector<128xf32>
    %156 = vector.shape_cast %155 : vector<128xf32> to vector<1x128xf32>
    %c8_i32_107 = arith.constant 8 : i32
    %157 = tpu.dynamic_rotate %156 by %c8_i32_107 dim 1 : vector<1x128xf32>, i32 -> vector<1x128xf32>
    %158 = arith.addf %156, %157 : vector<1x128xf32>
    %c16_i32_108 = arith.constant 16 : i32
    %159 = tpu.dynamic_rotate %158 by %c16_i32_108 dim 1 : vector<1x128xf32>, i32 -> vector<1x128xf32>
    %160 = arith.addf %158, %159 : vector<1x128xf32>
    %c32_i32_109 = arith.constant 32 : i32
    %161 = tpu.dynamic_rotate %160 by %c32_i32_109 dim 1 : vector<1x128xf32>, i32 -> vector<1x128xf32>
    %162 = arith.addf %160, %161 : vector<1x128xf32>
    %c64_i32_110 = arith.constant 64 : i32
    %163 = tpu.dynamic_rotate %162 by %c64_i32_110 dim 1 : vector<1x128xf32>, i32 -> vector<1x128xf32>
    %164 = arith.addf %162, %163 : vector<1x128xf32>
    %cst_111 = arith.constant 0.001953125 : f32
    %165 = vector.broadcast %cst_111 : f32 to vector<1x128xf32>
    %166 = arith.mulf %164, %165 : vector<1x128xf32>
    %167 = arith.mulf %154, %154 : vector<32x128xf32>
    %cst_112 = arith.constant dense<0.000000e+00> : vector<128xf32>
    %168 = vector.multi_reduction <add>, %167, %cst_112 [0] : vector<32x128xf32> to vector<128xf32>
    %169 = vector.shape_cast %168 : vector<128xf32> to vector<1x128xf32>
    %c8_i32_113 = arith.constant 8 : i32
    %170 = tpu.dynamic_rotate %169 by %c8_i32_113 dim 1 : vector<1x128xf32>, i32 -> vector<1x128xf32>
    %171 = arith.addf %169, %170 : vector<1x128xf32>
    %c16_i32_114 = arith.constant 16 : i32
    %172 = tpu.dynamic_rotate %171 by %c16_i32_114 dim 1 : vector<1x128xf32>, i32 -> vector<1x128xf32>
    %173 = arith.addf %171, %172 : vector<1x128xf32>
    %c32_i32_115 = arith.constant 32 : i32
    %174 = tpu.dynamic_rotate %173 by %c32_i32_115 dim 1 : vector<1x128xf32>, i32 -> vector<1x128xf32>
    %175 = arith.addf %173, %174 : vector<1x128xf32>
    %c64_i32_116 = arith.constant 64 : i32
    %176 = tpu.dynamic_rotate %175 by %c64_i32_116 dim 1 : vector<1x128xf32>, i32 -> vector<1x128xf32>
    %177 = arith.addf %175, %176 : vector<1x128xf32>
    %cst_117 = arith.constant 0.001953125 : f32
    %178 = vector.broadcast %cst_117 : f32 to vector<1x128xf32>
    %179 = arith.mulf %177, %178 : vector<1x128xf32>
    %180 = arith.mulf %166, %166 : vector<1x128xf32>
    %181 = arith.subf %179, %180 : vector<1x128xf32>
    %cst_118 = arith.constant 0.000000e+00 : f32
    %182 = vector.broadcast %cst_118 : f32 to vector<1x128xf32>
    %183 = arith.maximumf %181, %182 : vector<1x128xf32>
    %c2_119 = arith.constant 2 : index
    %c0_120 = arith.constant 0 : index
    %184 = vector.load %arg3[%c2_119, %c0_120] : memref<6x128xf32, #tpu.memory_space<vmem>>, vector<1x128xf32>
    %cst_121 = arith.constant 9.99999974E-6 : f32
    %185 = vector.broadcast %cst_121 : f32 to vector<1x128xf32>
    %186 = arith.addf %183, %185 : vector<1x128xf32>
    %187 = math.rsqrt %186 : vector<1x128xf32>
    %188 = arith.mulf %184, %187 : vector<1x128xf32>
    %c3 = arith.constant 3 : index
    %c0_122 = arith.constant 0 : index
    %189 = vector.load %arg3[%c3, %c0_122] : memref<6x128xf32, #tpu.memory_space<vmem>>, vector<1x128xf32>
    %190 = arith.mulf %166, %188 : vector<1x128xf32>
    %191 = arith.subf %189, %190 : vector<1x128xf32>
    %192 = vector.broadcast %188 : vector<1x128xf32> to vector<32x128xf32>
    %193 = arith.mulf %154, %192 : vector<32x128xf32>
    %194 = vector.broadcast %191 : vector<1x128xf32> to vector<32x128xf32>
    %195 = arith.addf %193, %194 : vector<32x128xf32>
    %196 = arith.addf %116, %195 : vector<32x128xf32>
    %cst_123 = arith.constant 0.000000e+00 : f32
    %197 = vector.broadcast %cst_123 : f32 to vector<32x128xf32>
    %198 = arith.maximumf %196, %197 : vector<32x128xf32>
    %c0_124 = arith.constant 0 : index
    %c0_125 = arith.constant 0 : index
    %199 = vector.load %arg4[%c0_124, %c0_125] : memref<32x128xf32, #tpu.memory_space<vmem>>, vector<32x128xf32>
    tpu.vector_store %arg4[%c0_124, %c0_125], %198 {strides = array<i32>} : memref<32x128xf32, #tpu.memory_space<vmem>>, vector<32x128xf32>,
    return
  }
}

</mosaic_0001>

<llo_original>
// kernel: tpu_custom_call.1
$region0: #{tpu_custom_call.1}
  #allocation0 [shape = 'u32[]', space=smem, size = 0x4, offset = 0x4, fixed_abs, tag = 'smem constant byte address 0x4 - core index']
  #allocation1 [shape = 'u32[144,128]{1,0:T(1,128)}', space=vmem, size = 0x12000, scoped, tag = 'internal scratch']
  #allocation2 [shape = 'bf16[2,18,144]{2,1,0:T(8,128)(2,1)}', space=vmem, size = 0x6000, scoped, tag = 'scratch operand']
  %s0 = inlined_call_operand.hbm [shape: f32[2,16,64], index: 0, kind: input, shape index: {}]
  %s1 = inlined_call_operand.hbm [shape: bf16[3,72,256], index: 1, kind: input, shape index: {}]
  %s2 = inlined_call_operand.hbm [shape: bf16[3,144,128], index: 2, kind: input, shape index: {}]
  %s3 = inlined_call_operand.vmem [shape: f32[6,128], index: 3, kind: input, shape index: {}]
  %s4 = inlined_call_operand.hbm [shape: f32[32,128], index: 4, kind: output, shape index: {}]
  %s5 = sld [smem:[#allocation0]]
  $region38: #{tpu_custom_call.1} parent=0
    _
  %s7 = ssub.s32 1, %s5
  %s8 = scalar_select 0, %s7, %s5
  $region1: #{tpu_custom_call.1} parent=0
    #allocation3 [shape = 'u8[16384]{0}', space=vmem, size = 0x4000, scoped, tag = 'input window, operand 0, single buffered']
    #allocation4 [shape = 's32[1]{0}', space=sflag, size = 0x4, scoped, tag = 'scoped memory for tpu_custom_call.1']
    #allocation5 [shape = 's32[1]{0}', space=sflag, size = 0x4, scoped, tag = 'scoped memory for tpu_custom_call.1']
    #allocation6 [shape = 'u8[110592]{0}', space=vmem, size = 0x1b000, scoped, tag = 'input window, operand 1, single buffered']
    #allocation7 [shape = 's32[1]{0}', space=sflag, size = 0x4, scoped, tag = 'scoped memory for tpu_custom_call.1']
    #allocation8 [shape = 'u8[110592]{0}', space=vmem, size = 0x1b000, scoped, tag = 'input window, operand 2, single buffered']
    #allocation9 [shape = 'u8[16384]{0}', space=vmem, size = 0x4000, scoped, tag = 'output window, operand 0, single buffered']
    %9 = vsyncpa [#allocation4], 0
    %10 = vsyncpa [#allocation7], 0
    %11 = vsyncpa [#allocation5], 0
    // Predicated region
    $region2: #{tpu_custom_call.1} parent=1 // pred_check
      _
    $region3: #{tpu_custom_call.1} parent=1 // pred_check_branch
      %13 = sbr.rel (0) target = $region5
    $region4: #{tpu_custom_call.1} parent=1 // pred_region
      %s15 = ssub.s32 512, 512
      %16 = vsyncadd [#allocation4], %s15
      %s17 = sshll.u32 [#allocation3], 4
      %s18 = int_to_ptr.vmem [resolvable:$true] %s17
      %23 = dma.hbm_to_vmem [thread:$0]  %s0, 512, %s18, [#allocation4], 128, 128, 8
    $region5: #{tpu_custom_call.1} parent=1 // pred_fallthru
      _
    // Predicated region
    $region6: #{tpu_custom_call.1} parent=1 // pred_check
      _
    $region7: #{tpu_custom_call.1} parent=1 // pred_check_branch
      %25 = sbr.rel (0) target = $region9
    $region8: #{tpu_custom_call.1} parent=1 // pred_region
      %s27 = ssub.s32 3456, 3456
      %28 = vsyncadd [#allocation7], %s27
      %s29 = sshll.u32 [#allocation6], 4
      %s30 = int_to_ptr.vmem [resolvable:$true] %s29
      %35 = dma.hbm_to_vmem [thread:$0]  %s1, 3456, %s30, [#allocation7], 128, 128, 8
    $region9: #{tpu_custom_call.1} parent=1 // pred_fallthru
      _
    // Predicated region
    $region10: #{tpu_custom_call.1} parent=1 // pred_check
      _
    $region11: #{tpu_custom_call.1} parent=1 // pred_check_branch
      %37 = sbr.rel (0) target = $region13
    $region12: #{tpu_custom_call.1} parent=1 // pred_region
      %s39 = ssub.s32 3456, 3456
      %40 = vsyncadd [#allocation7], %s39
      %s41 = sshll.u32 [#allocation8], 4
      %s42 = int_to_ptr.vmem [resolvable:$true] %s41
      %47 = dma.hbm_to_vmem [thread:$0]  %s2, 3456, %s42, [#allocation7], 64, 64, 4
    $region13: #{tpu_custom_call.1} parent=1 // pred_fallthru
      _
    // Predicated region
    $region14: #{tpu_custom_call.1} parent=1 // pred_check
      _
    $region15: #{tpu_custom_call.1} parent=1 // pred_check_branch
      %49 = sbr.rel (0) target = $region17
    $region16: #{tpu_custom_call.1} parent=1 // pred_region
      _
    $region17: #{tpu_custom_call.1} parent=1 // pred_fallthru
      _
    // Predicated region
    $region18: #{tpu_custom_call.1} parent=1 // pred_check
      _
    $region19: #{tpu_custom_call.1} parent=1 // pred_check_branch
      %51 = sbr.rel (0) target = $region21
    $region20: #{tpu_custom_call.1} parent=1 // pred_region
      %52 = dma.done [#allocation4], 512
    $region21: #{tpu_custom_call.1} parent=1 // pred_fallthru
      _
    // Predicated region
    $region22: #{tpu_custom_call.1} parent=1 // pred_check
      _
    $region23: #{tpu_custom_call.1} parent=1 // pred_check_branch
      %54 = sbr.rel (0) target = $region25
    $region24: #{tpu_custom_call.1} parent=1 // pred_region
      %55 = dma.done [#allocation7], 3456
    $region25: #{tpu_custom_call.1} parent=1 // pred_fallthru
      _
    // Predicated region
    $region26: #{tpu_custom_call.1} parent=1 // pred_check
      _
    $region27: #{tpu_custom_call.1} parent=1 // pred_check_branch
      %57 = sbr.rel (0) target = $region29
    $region28: #{tpu_custom_call.1} parent=1 // pred_region
      %58 = dma.done [#allocation7], 3456
    $region29: #{tpu_custom_call.1} parent=1 // pred_fallthru
      _
    %vm60 = vcmask 1043456
    %vm61 = vcmask 130052
    %vm62 = vmor %vm61, %vm60
    %63 = vst.msk [vmem:[#allocation2] sm:$0xff] %vm62, 0
    %64 = vst.msk [vmem:[#allocation2 + $0x8] sm:$0xff] %vm62, 0
    %vm65 = vcmask 1040384
    %vm66 = vcmask 126980
    %vm67 = vmor %vm66, %vm65
    %68 = vst.msk [vmem:[#allocation2 + $0x10] sm:$0x11] %vm67, 0
    %69 = vst.msk [vmem:[#allocation2 + $0x18] sm:$0xff] %vm62, 0
    %70 = vst.msk [vmem:[#allocation2 + $0x20] sm:$0xff] %vm62, 0
    %71 = vst.msk [vmem:[#allocation2 + $0x28] sm:$0x11] %vm67, 0
    %v72 = vld [vmem:[#allocation3] sm:$0xff]
    %v73 = vld [vmem:[#allocation3 + $0x8] sm:$0xff]
    %v74 = vld [vmem:[#allocation3 + $0x10] sm:$0xff]
    %v75 = vld [vmem:[#allocation3 + $0x18] sm:$0xff]
    %v76 = vpack.c.bf16 %v73, %v72
    %v77 = vpack.c.bf16 %v75, %v74
    %v80 = vunpack.c.l.b16 %v76
    %v81 = vunpack.c.h.b16 %v76
    %v82 = vunpack.c.l.b16 %v77
    %v83 = vunpack.c.h.b16 %v77
    %v84 = vpack.c.b16 %v80, %v80
    %v85 = vpack.c.b16 %v81, %v81
    %v86 = vpack.c.b16 %v82, %v82
    %v87 = vpack.c.b16 %v83, %v83
    %vm88 = vsmask.f32 256
    %vm89 = vsmask.f32 4368
    %vm90 = vmor %vm88, %vm89
    %v92 = vshrl.u32 %v84, 16
    %v94 = vrot.slane %v92, 7
    %v95 = vshll.u32 %v84, 16
    %v97 = vor.u32 %v94, %v95
    %v98 = vrot.slane %v94, 4
    %v100 = vshrl.u32 %v85, 16
    %v102 = vrot.slane %v100, 7
    %v103 = vshll.u32 %v85, 16
    %v105 = vor.u32 %v102, %v103
    %v106 = vsel %vm90, %v98, %v105
    %v107 = vrot.slane %v102, 4
    %v109 = vshrl.u32 %v86, 16
    %v111 = vrot.slane %v109, 7
    %v112 = vshll.u32 %v86, 16
    %v114 = vor.u32 %v111, %v112
    %v115 = vrot.slane %v111, 4
    %v117 = vshrl.u32 %v87, 16
    %v119 = vrot.slane %v117, 7
    %v120 = vshll.u32 %v87, 16
    %v122 = vor.u32 %v119, %v120
    %v123 = vsel %vm90, %v115, %v122
    %v124 = vrot.slane %v119, 4
    %125 = vrot.lane.b32.xlu0 %v97, 4
    %v126 = vpop.permute.xlu0 %125
    %127 = vrot.lane.b32.xlu0 %v106, 4
    %v128 = vpop.permute.xlu0 %127
    %129 = vrot.lane.b32.xlu0 %v107, 4
    %v130 = vpop.permute.xlu0 %129
    %131 = vrot.lane.b32.xlu0 %v114, 4
    %v132 = vpop.permute.xlu0 %131
    %133 = vrot.lane.b32.xlu0 %v123, 4
    %v134 = vpop.permute.xlu0 %133
    %135 = vrot.lane.b32.xlu0 %v124, 4
    %v136 = vpop.permute.xlu0 %135
    %vm143 = vcmask 551968
    %vm144 = vsmask.f32 7938
    %vm145 = vmand %vm143, %vm144
    %v146 = vld [vmem:[#allocation2] sm:$0xf]
    %v147 = vsel %vm145, %v126, %v146
    %148 = vst [vmem:[#allocation2] sm:$0xf] %v147
    %vm149 = vcmask 551968
    %150 = vst.msk [vmem:[#allocation2 + $0x8] sm:$0xf] %vm149, %v128
    %vm151 = vcmask 548896
    %vm152 = vmand %vm151, %vm88
    %v153 = vld [vmem:[#allocation2 + $0x10] sm:$0x1]
    %v154 = vsel %vm152, %v130, %v153
    %155 = vst [vmem:[#allocation2 + $0x10] sm:$0x1] %v154
    %v156 = vld [vmem:[#allocation2 + $0x18] sm:$0xf]
    %v157 = vsel %vm145, %v132, %v156
    %158 = vst [vmem:[#allocation2 + $0x18] sm:$0xf] %v157
    %159 = vst.msk [vmem:[#allocation2 + $0x20] sm:$0xf] %vm149, %v134
    %v160 = vld [vmem:[#allocation2 + $0x28] sm:$0x1]
    %v161 = vsel %vm152, %v136, %v160
    %162 = vst [vmem:[#allocation2 + $0x28] sm:$0x1] %v161
    %v163 = vld [vmem:[#allocation2] sm:$0xf]
    %v164 = vld [vmem:[#allocation2 + $0x8] sm:$0xf]
    %s165 = scalar_lea.vmem [#allocation2], 24
    %v166 = vld [vmem:[%s165] sm:$0xf]
    %v167 = vld [vmem:[%s165 + $0x8] sm:$0xf]
    %v170 = vunpack.c.l.b16 %v163
    %v171 = vunpack.c.l.b16 %v164
    %v172 = vpack.c.b16 %v171, %v170
    %v175 = vunpack.c.l.b16 %v166
    %v176 = vunpack.c.l.b16 %v167
    %v177 = vpack.c.b16 %v176, %v175
    %v178 = vld [vmem:[#allocation6] sm:$0xff]
    %v179 = vld [vmem:[#allocation6 + $0x8] sm:$0xff]
    %v180 = vld [vmem:[#allocation6 + $0x10] sm:$0xff]
    %v181 = vld [vmem:[#allocation6 + $0x18] sm:$0xff]
    %v182 = vld [vmem:[#allocation6 + $0x20] sm:$0xff]
    %v183 = vld [vmem:[#allocation6 + $0x28] sm:$0xff]
    %v184 = vld [vmem:[#allocation6 + $0x30] sm:$0xff]
    %v185 = vld [vmem:[#allocation6 + $0x38] sm:$0xff]
    %v186 = vld [vmem:[#allocation6 + $0x40] sm:$0xff]
    %v187 = vld [vmem:[#allocation2 + $0x10] sm:$0x1]
    %v188 = vld [vmem:[%s165 + $0x10] sm:$0x1]
    %v190 = vunpack.c.l.b16 %v187
    %v191 = vpack.c.b16 %v190, %v190
    %vm192 = vsmask.f32 7424
    %v194 = vshrl.u32 %v172, 16
    %v196 = vshll.u32 %v172, 16
    %v198 = vrot.slane %v196, 1
    %v199 = vor.u32 %v194, %v198
    %v201 = vshll.u32 %v191, 16
    %v203 = vrot.slane %v201, 1
    %v204 = vsel %vm192, %v199, %v203
    %v206 = vunpack.c.l.b16 %v188
    %v207 = vpack.c.b16 %v206, %v206
    %v209 = vshrl.u32 %v177, 16
    %v211 = vshll.u32 %v177, 16
    %v213 = vrot.slane %v211, 1
    %v214 = vor.u32 %v209, %v213
    %v216 = vshll.u32 %v207, 16
    %v218 = vrot.slane %v216, 1
    %v219 = vsel %vm192, %v214, %v218
    %s220 = scalar_lea.vmem [#allocation6], 72
    %v221 = vld [vmem:[%s220] sm:$0xff]
    %v222 = vld [vmem:[%s220 + $0x8] sm:$0xff]
    %v223 = vld [vmem:[%s220 + $0x10] sm:$0xff]
    %v224 = vld [vmem:[%s220 + $0x18] sm:$0xff]
    %v225 = vld [vmem:[%s220 + $0x20] sm:$0xff]
    %v226 = vld [vmem:[%s220 + $0x28] sm:$0xff]
    %v227 = vld [vmem:[%s220 + $0x30] sm:$0xff]
    %v228 = vld [vmem:[%s220 + $0x38] sm:$0xff]
    %v229 = vld [vmem:[%s220 + $0x40] sm:$0xff]
    %v239 = vunpack.c.l.b16 %v221
    %v240 = vunpack.c.h.b16 %v221
    %v241 = vunpack.c.l.b16 %v222
    %v242 = vunpack.c.h.b16 %v222
    %v243 = vunpack.c.l.b16 %v223
    %v244 = vunpack.c.h.b16 %v223
    %v245 = vunpack.c.l.b16 %v224
    %v246 = vunpack.c.h.b16 %v224
    %v247 = vunpack.c.l.b16 %v225
    %v248 = vunpack.c.h.b16 %v225
    %v249 = vunpack.c.l.b16 %v226
    %v250 = vunpack.c.h.b16 %v226
    %v251 = vunpack.c.l.b16 %v227
    %v252 = vunpack.c.h.b16 %v227
    %v253 = vunpack.c.l.b16 %v228
    %v254 = vunpack.c.h.b16 %v228
    %v255 = vunpack.c.l.b16 %v229
    %v256 = vunpack.c.h.b16 %v229
    %v257 = vpack.c.b16 %v241, %v239
    %v258 = vpack.c.b16 %v242, %v240
    %v259 = vpack.c.b16 %v245, %v243
    %v260 = vpack.c.b16 %v246, %v244
    %v261 = vpack.c.b16 %v249, %v247
    %v262 = vpack.c.b16 %v250, %v248
    %v263 = vpack.c.b16 %v253, %v251
    %v264 = vpack.c.b16 %v254, %v252
    %v265 = vpack.c.b16 %v255, %v255
    %v266 = vpack.c.b16 %v256, %v256
    %vm275 = vcmask 588800
    %v277 = vsel %vm275, %v204, 0
    %v280 = vsel %vm275, %v219, 0
    %v283 = vsel %vm60, %v265, 0
    %v286 = vsel %vm60, %v266, 0
    %288 = vmatprep.subr.bf16.mxu0 %v258
    %289 = vmatpush1.bf16.msra.mxu0 %v257
    %290 = vmatprep.subr.bf16.mxu0 %v260
    %291 = vmatpush1.bf16.msra.mxu0 %v259
    %292 = vmatprep.subr.bf16.mxu0 %v262
    %293 = vmatpush1.bf16.msra.mxu0 %v261
    %294 = vmatprep.subr.bf16.mxu0 %v264
    %295 = vmatpush1.bf16.msra.mxu0 %v263
    %296 = vmatprep.subr.bf16.mxu0 %v286
    %297 = vmatpush1.bf16.msra.mxu0 %v283
    %298 = vmatprep.subr.bf16.mxu0 0
    %299 = vmatpush1.bf16.msra.mxu0 0
    %300 = vmatprep.subr.bf16.mxu0 0
    %301 = vmatpush1.bf16.msra.mxu0 0
    %302 = vmatprep.subr.bf16.mxu0 0
    %303 = vmatpush1.bf16.msra.mxu0 0
    %304 = vmatprep.subr.bf16.mxu0 0
    %305 = vmatpush1.bf16.msra.mxu0 0
    %306 = vmatprep.subr.bf16.mxu0 0
    %307 = vmatpush1.bf16.msra.mxu0 0
    %308 = vmatprep.subr.bf16.mxu0 0
    %309 = vmatpush1.bf16.msra.mxu0 0
    %310 = vmatprep.subr.bf16.mxu0 0
    %311 = vmatpush1.bf16.msra.mxu0 0
    %312 = vmatprep.subr.bf16.mxu0 0
    %313 = vmatpush1.bf16.msra.mxu0 0
    %314 = vmatprep.subr.bf16.mxu0 0
    %315 = vmatpush1.bf16.msra.mxu0 0
    %316 = vmatprep.subr.bf16.mxu0 0
    %317 = vmatpush1.bf16.msra.mxu0 0
    %318 = vmatprep.subr.bf16.mxu0 0
    %319 = vmatpush1.bf16.msra.mxu0 0
    %320 = vmatprep.mubr.bf16.mxu0 0
    %321 = vmatmul.mubr.bf16.gmra.mrb[0].mxu0 %v277
    %v322 = vpop.f32.mrb[0].mxu0
    %v323 = vadd.f32 0.0, %v322
    %v324 = vpop.f32.mrb[0].mxu0
    %v325 = vadd.f32 0.0, %v324
    %v326 = vpop.f32.mrb[0].mxu0
    %v327 = vadd.f32 0.0, %v326
    %v328 = vpop.f32.mrb[0].mxu0
    %v329 = vadd.f32 0.0, %v328
    %330 = vmatprep.mubr.bf16.mxu0 0
    %331 = vmatmul.mubr.bf16.gmra.mrb[0].mxu0 %v280
    %v332 = vpop.f32.mrb[0].mxu0
    %v333 = vadd.f32 0.0, %v332
    %v334 = vpop.f32.mrb[0].mxu0
    %v335 = vadd.f32 0.0, %v334
    %v336 = vpop.f32.mrb[0].mxu0
    %v337 = vadd.f32 0.0, %v336
    %v338 = vpop.f32.mrb[0].mxu0
    %v339 = vadd.f32 0.0, %v338
    %340 = vdwg.mxu0
    %v350 = vunpack.c.l.b16 %v178
    %v351 = vunpack.c.h.b16 %v178
    %v352 = vunpack.c.l.b16 %v179
    %v353 = vunpack.c.h.b16 %v179
    %v354 = vunpack.c.l.b16 %v180
    %v355 = vunpack.c.h.b16 %v180
    %v356 = vunpack.c.l.b16 %v181
    %v357 = vunpack.c.h.b16 %v181
    %v358 = vunpack.c.l.b16 %v182
    %v359 = vunpack.c.h.b16 %v182
    %v360 = vunpack.c.l.b16 %v183
    %v361 = vunpack.c.h.b16 %v183
    %v362 = vunpack.c.l.b16 %v184
    %v363 = vunpack.c.h.b16 %v184
    %v364 = vunpack.c.l.b16 %v185
    %v365 = vunpack.c.h.b16 %v185
    %v366 = vunpack.c.l.b16 %v186
    %v367 = vunpack.c.h.b16 %v186
    %v368 = vpack.c.b16 %v352, %v350
    %v369 = vpack.c.b16 %v353, %v351
    %v370 = vpack.c.b16 %v356, %v354
    %v371 = vpack.c.b16 %v357, %v355
    %v372 = vpack.c.b16 %v360, %v358
    %v373 = vpack.c.b16 %v361, %v359
    %v374 = vpack.c.b16 %v364, %v362
    %v375 = vpack.c.b16 %v365, %v363
    %v376 = vpack.c.b16 %v366, %v366
    %v377 = vpack.c.b16 %v367, %v367
    %v386 = vsel %vm275, %v172, 0
    %v388 = vsel %vm275, %v177, 0
    %v391 = vsel %vm60, %v376, 0
    %v394 = vsel %vm60, %v377, 0
    %396 = vmatprep.subr.bf16.mxu0 %v369
    %397 = vmatpush1.bf16.msra.mxu0 %v368
    %398 = vmatprep.subr.bf16.mxu0 %v371
    %399 = vmatpush1.bf16.msra.mxu0 %v370
    %400 = vmatprep.subr.bf16.mxu0 %v373
    %401 = vmatpush1.bf16.msra.mxu0 %v372
    %402 = vmatprep.subr.bf16.mxu0 %v375
    %403 = vmatpush1.bf16.msra.mxu0 %v374
    %404 = vmatprep.subr.bf16.mxu0 %v394
    %405 = vmatpush1.bf16.msra.mxu0 %v391
    %406 = vmatprep.subr.bf16.mxu0 0
    %407 = vmatpush1.bf16.msra.mxu0 0
    %408 = vmatprep.subr.bf16.mxu0 0
    %409 = vmatpush1.bf16.msra.mxu0 0
    %410 = vmatprep.subr.bf16.mxu0 0
    %411 = vmatpush1.bf16.msra.mxu0 0
    %412 = vmatprep.subr.bf16.mxu0 0
    %413 = vmatpush1.bf16.msra.mxu0 0
    %414 = vmatprep.subr.bf16.mxu0 0
    %415 = vmatpush1.bf16.msra.mxu0 0
    %416 = vmatprep.subr.bf16.mxu0 0
    %417 = vmatpush1.bf16.msra.mxu0 0
    %418 = vmatprep.subr.bf16.mxu0 0
    %419 = vmatpush1.bf16.msra.mxu0 0
    %420 = vmatprep.subr.bf16.mxu0 0
    %421 = vmatpush1.bf16.msra.mxu0 0
    %422 = vmatprep.subr.bf16.mxu0 0
    %423 = vmatpush1.bf16.msra.mxu0 0
    %424 = vmatprep.subr.bf16.mxu0 0
    %425 = vmatpush1.bf16.msra.mxu0 0
    %426 = vmatprep.subr.bf16.mxu0 0
    %427 = vmatpush1.bf16.msra.mxu0 0
    %428 = vmatprep.mubr.bf16.mxu0 0
    %429 = vmatmul.mubr.bf16.gmra.mrb[0].mxu0 %v386
    %v430 = vpop.f32.mrb[0].mxu0
    %v431 = vadd.f32 %v323, %v430
    %v432 = vpop.f32.mrb[0].mxu0
    %v433 = vadd.f32 %v325, %v432
    %v434 = vpop.f32.mrb[0].mxu0
    %v435 = vadd.f32 %v327, %v434
    %v436 = vpop.f32.mrb[0].mxu0
    %v437 = vadd.f32 %v329, %v436
    %438 = vmatprep.mubr.bf16.mxu0 0
    %439 = vmatmul.mubr.bf16.gmra.mrb[0].mxu0 %v388
    %v440 = vpop.f32.mrb[0].mxu0
    %v441 = vadd.f32 %v333, %v440
    %v442 = vpop.f32.mrb[0].mxu0
    %v443 = vadd.f32 %v335, %v442
    %v444 = vpop.f32.mrb[0].mxu0
    %v445 = vadd.f32 %v337, %v444
    %v446 = vpop.f32.mrb[0].mxu0
    %v447 = vadd.f32 %v339, %v446
    %448 = vdwg.mxu0
    %v449 = vld [vmem:[#allocation2] sm:$0xe]
    %v450 = vld [vmem:[%s165] sm:$0xe]
    %v452 = vunpack.c.l.b16 %v449
    %v453 = vpack.c.b16 %v171, %v452
    %vm454 = vcmask 1046528
    %v455 = vrot.slane %v453, 1
    %v456 = vrot.slane %v191, 1
    %v457 = vsel %vm454, %v455, %v456
    %v459 = vunpack.c.l.b16 %v450
    %v460 = vpack.c.b16 %v176, %v459
    %v461 = vrot.slane %v460, 1
    %v462 = vrot.slane %v207, 1
    %v463 = vsel %vm454, %v461, %v462
    %s464 = scalar_lea.vmem [#allocation6], 144
    %v465 = vld [vmem:[%s464] sm:$0xff]
    %v466 = vld [vmem:[%s464 + $0x8] sm:$0xff]
    %v467 = vld [vmem:[%s464 + $0x10] sm:$0xff]
    %v468 = vld [vmem:[%s464 + $0x18] sm:$0xff]
    %v469 = vld [vmem:[%s464 + $0x20] sm:$0xff]
    %v470 = vld [vmem:[%s464 + $0x28] sm:$0xff]
    %v471 = vld [vmem:[%s464 + $0x30] sm:$0xff]
    %v472 = vld [vmem:[%s464 + $0x38] sm:$0xff]
    %v473 = vld [vmem:[%s464 + $0x40] sm:$0xff]
    %v483 = vunpack.c.l.b16 %v465
    %v484 = vunpack.c.h.b16 %v465
    %v485 = vunpack.c.l.b16 %v466
    %v486 = vunpack.c.h.b16 %v466
    %v487 = vunpack.c.l.b16 %v467
    %v488 = vunpack.c.h.b16 %v467
    %v489 = vunpack.c.l.b16 %v468
    %v490 = vunpack.c.h.b16 %v468
    %v491 = vunpack.c.l.b16 %v469
    %v492 = vunpack.c.h.b16 %v469
    %v493 = vunpack.c.l.b16 %v470
    %v494 = vunpack.c.h.b16 %v470
    %v495 = vunpack.c.l.b16 %v471
    %v496 = vunpack.c.h.b16 %v471
    %v497 = vunpack.c.l.b16 %v472
    %v498 = vunpack.c.h.b16 %v472
    %v499 = vunpack.c.l.b16 %v473
    %v500 = vunpack.c.h.b16 %v473
    %v501 = vpack.c.b16 %v485, %v483
    %v502 = vpack.c.b16 %v486, %v484
    %v503 = vpack.c.b16 %v489, %v487
    %v504 = vpack.c.b16 %v490, %v488
    %v505 = vpack.c.b16 %v493, %v491
    %v506 = vpack.c.b16 %v494, %v492
    %v507 = vpack.c.b16 %v497, %v495
    %v508 = vpack.c.b16 %v498, %v496
    %v509 = vpack.c.b16 %v499, %v499
    %v510 = vpack.c.b16 %v500, %v500
    %v520 = vsel %vm275, %v457, 0
    %v523 = vsel %vm275, %v463, 0
    %v526 = vsel %vm60, %v509, 0
    %v529 = vsel %vm60, %v510, 0
    %531 = vmatprep.subr.bf16.mxu0 %v502
    %532 = vmatpush1.bf16.msra.mxu0 %v501
    %533 = vmatprep.subr.bf16.mxu0 %v504
    %534 = vmatpush1.bf16.msra.mxu0 %v503
    %535 = vmatprep.subr.bf16.mxu0 %v506
    %536 = vmatpush1.bf16.msra.mxu0 %v505
    %537 = vmatprep.subr.bf16.mxu0 %v508
    %538 = vmatpush1.bf16.msra.mxu0 %v507
    %539 = vmatprep.subr.bf16.mxu0 %v529
    %540 = vmatpush1.bf16.msra.mxu0 %v526
    %541 = vmatprep.subr.bf16.mxu0 0
    %542 = vmatpush1.bf16.msra.mxu0 0
    %543 = vmatprep.subr.bf16.mxu0 0
    %544 = vmatpush1.bf16.msra.mxu0 0
    %545 = vmatprep.subr.bf16.mxu0 0
    %546 = vmatpush1.bf16.msra.mxu0 0
    %547 = vmatprep.subr.bf16.mxu0 0
    %548 = vmatpush1.bf16.msra.mxu0 0
    %549 = vmatprep.subr.bf16.mxu0 0
    %550 = vmatpush1.bf16.msra.mxu0 0
    %551 = vmatprep.subr.bf16.mxu0 0
    %552 = vmatpush1.bf16.msra.mxu0 0
    %553 = vmatprep.subr.bf16.mxu0 0
    %554 = vmatpush1.bf16.msra.mxu0 0
    %555 = vmatprep.subr.bf16.mxu0 0
    %556 = vmatpush1.bf16.msra.mxu0 0
    %557 = vmatprep.subr.bf16.mxu0 0
    %558 = vmatpush1.bf16.msra.mxu0 0
    %559 = vmatprep.subr.bf16.mxu0 0
    %560 = vmatpush1.bf16.msra.mxu0 0
    %561 = vmatprep.subr.bf16.mxu0 0
    %562 = vmatpush1.bf16.msra.mxu0 0
    %563 = vmatprep.mubr.bf16.mxu0 0
    %564 = vmatmul.mubr.bf16.gmra.mrb[0].mxu0 %v520
    %v565 = vpop.f32.mrb[0].mxu0
    %v566 = vadd.f32 0.0, %v565
    %v567 = vpop.f32.mrb[0].mxu0
    %v568 = vadd.f32 0.0, %v567
    %v569 = vpop.f32.mrb[0].mxu0
    %v570 = vadd.f32 0.0, %v569
    %v571 = vpop.f32.mrb[0].mxu0
    %v572 = vadd.f32 0.0, %v571
    %573 = vmatprep.mubr.bf16.mxu0 0
    %574 = vmatmul.mubr.bf16.gmra.mrb[0].mxu0 %v523
    %v575 = vpop.f32.mrb[0].mxu0
    %v576 = vadd.f32 0.0, %v575
    %v577 = vpop.f32.mrb[0].mxu0
    %v578 = vadd.f32 0.0, %v577
    %v579 = vpop.f32.mrb[0].mxu0
    %v580 = vadd.f32 0.0, %v579
    %v581 = vpop.f32.mrb[0].mxu0
    %v582 = vadd.f32 0.0, %v581
    %583 = vdwg.mxu0
    %v584 = vadd.f32 %v431, %v566
    %v585 = vadd.f32 %v433, %v568
    %v586 = vadd.f32 %v435, %v570
    %v587 = vadd.f32 %v437, %v572
    %v588 = vadd.f32 %v441, %v576
    %v589 = vadd.f32 %v443, %v578
    %v590 = vadd.f32 %v445, %v580
    %v591 = vadd.f32 %v447, %v582
    %v592 = vadd.f32 %v584, %v586
    %v593 = vadd.f32 %v592, %v588
    %v594 = vadd.f32 %v593, %v590
    %v595 = vrot.slane %v594, 4
    %v596 = vadd.f32 %v594, %v595
    %v597 = vrot.slane %v596, 2
    %v598 = vadd.f32 %v596, %v597
    %v599 = vrot.slane %v598, 1
    %v600 = vadd.f32 %v598, %v599
    %601 = vrot.lane.b32.xlu0 %v600, 8
    %v602 = vpop.permute.xlu0 %601
    %v603 = vadd.f32 %v600, %v602
    %604 = vrot.lane.b32.xlu0 %v603, 16
    %v605 = vpop.permute.xlu0 %604
    %v606 = vadd.f32 %v603, %v605
    %607 = vrot.lane.b32.xlu0 %v606, 32
    %v608 = vpop.permute.xlu0 %607
    %v609 = vadd.f32 %v606, %v608
    %610 = vrot.lane.b32.xlu0 %v609, 64
    %v611 = vpop.permute.xlu0 %610
    %v612 = vadd.f32 %v609, %v611
    %v613 = vmul.f32 %v612, 0.001953125
    %v614 = vmul.f32 %v584, %v584
    %v615 = vmul.f32 %v586, %v586
    %v616 = vmul.f32 %v588, %v588
    %v617 = vmul.f32 %v590, %v590
    %v618 = vadd.f32 %v614, %v615
    %v619 = vadd.f32 %v618, %v616
    %v620 = vadd.f32 %v619, %v617
    %v621 = vrot.slane %v620, 4
    %v622 = vadd.f32 %v620, %v621
    %v623 = vrot.slane %v622, 2
    %v624 = vadd.f32 %v622, %v623
    %v625 = vrot.slane %v624, 1
    %v626 = vadd.f32 %v624, %v625
    %627 = vrot.lane.b32.xlu0 %v626, 8
    %v628 = vpop.permute.xlu0 %627
    %v629 = vadd.f32 %v626, %v628
    %630 = vrot.lane.b32.xlu0 %v629, 16
    %v631 = vpop.permute.xlu0 %630
    %v632 = vadd.f32 %v629, %v631
    %633 = vrot.lane.b32.xlu0 %v632, 32
    %v634 = vpop.permute.xlu0 %633
    %v635 = vadd.f32 %v632, %v634
    %636 = vrot.lane.b32.xlu0 %v635, 64
    %v637 = vpop.permute.xlu0 %636
    %v638 = vadd.f32 %v635, %v637
    %v639 = vmul.f32 %v638, 0.001953125
    %v640 = vmul.f32 %v613, %v613
    %v641 = vsub.f32 %v639, %v640
    %v642 = vmax.f32 %v641, 0.0
    %v643 = vld [vmem:[%s3] sm:$0x1]
    %v644 = vadd.f32 %v642, 1e-05
    %v645 = vrsqrt.pop %v644
    %v646 = vmul.f32 %v643, %v645
    %v647 = vld [vmem:[%s3 + $0x1] sm:$0x1]
    %v648 = vmul.f32 %v613, %v646
    %v649 = vsub.f32 %v647, %v648
    %v650 = vlaneseq
    %v651 = vshrl.u32 %v650, 7
    %v652 = vsub.s32 0, %v651
    %v653 = vrot.slane %v646, %v652
    %v654 = vmul.f32 %v584, %v653
    %v655 = vmul.f32 %v586, %v653
    %v656 = vmul.f32 %v588, %v653
    %v657 = vmul.f32 %v590, %v653
    %v658 = vlaneseq
    %v659 = vshrl.u32 %v658, 7
    %v660 = vsub.s32 0, %v659
    %v661 = vrot.slane %v649, %v660
    %v662 = vadd.f32 %v654, %v661
    %v663 = vadd.f32 %v655, %v661
    %v664 = vadd.f32 %v656, %v661
    %v665 = vadd.f32 %v657, %v661
    %v666 = vmax.f32 %v662, 0.0
    %v667 = vmax.f32 %v663, 0.0
    %v668 = vmax.f32 %v664, 0.0
    %v669 = vmax.f32 %v665, 0.0
    %v670 = vadd.f32 %v585, %v587
    %v671 = vadd.f32 %v670, %v589
    %v672 = vadd.f32 %v671, %v591
    %v673 = vrot.slane %v672, 4
    %v674 = vadd.f32 %v672, %v673
    %v675 = vrot.slane %v674, 2
    %v676 = vadd.f32 %v674, %v675
    %v677 = vrot.slane %v676, 1
    %v678 = vadd.f32 %v676, %v677
    %679 = vrot.lane.b32.xlu0 %v678, 8
    %v680 = vpop.permute.xlu0 %679
    %v681 = vadd.f32 %v678, %v680
    %682 = vrot.lane.b32.xlu0 %v681, 16
    %v683 = vpop.permute.xlu0 %682
    %v684 = vadd.f32 %v681, %v683
    %685 = vrot.lane.b32.xlu0 %v684, 32
    %v686 = vpop.permute.xlu0 %685
    %v687 = vadd.f32 %v684, %v686
    %688 = vrot.lane.b32.xlu0 %v687, 64
    %v689 = vpop.permute.xlu0 %688
    %v690 = vadd.f32 %v687, %v689
    %v691 = vmul.f32 %v690, 0.001953125
    %v692 = vmul.f32 %v585, %v585
    %v693 = vmul.f32 %v587, %v587
    %v694 = vmul.f32 %v589, %v589
    %v695 = vmul.f32 %v591, %v591
    %v696 = vadd.f32 %v692, %v693
    %v697 = vadd.f32 %v696, %v694
    %v698 = vadd.f32 %v697, %v695
    %v699 = vrot.slane %v698, 4
    %v700 = vadd.f32 %v698, %v699
    %v701 = vrot.slane %v700, 2
    %v702 = vadd.f32 %v700, %v701
    %v703 = vrot.slane %v702, 1
    %v704 = vadd.f32 %v702, %v703
    %705 = vrot.lane.b32.xlu0 %v704, 8
    %v706 = vpop.permute.xlu0 %705
    %v707 = vadd.f32 %v704, %v706
    %708 = vrot.lane.b32.xlu0 %v707, 16
    %v709 = vpop.permute.xlu0 %708
    %v710 = vadd.f32 %v707, %v709
    %711 = vrot.lane.b32.xlu0 %v710, 32
    %v712 = vpop.permute.xlu0 %711
    %v713 = vadd.f32 %v710, %v712
    %714 = vrot.lane.b32.xlu0 %v713, 64
    %v715 = vpop.permute.xlu0 %714
    %v716 = vadd.f32 %v713, %v715
    %v717 = vmul.f32 %v716, 0.001953125
    %v718 = vmul.f32 %v691, %v691
    %v719 = vsub.f32 %v717, %v718
    %v720 = vmax.f32 %v719, 0.0
    %v721 = vld [vmem:[%s3 + $0x4] sm:$0x1]
    %v722 = vadd.f32 %v720, 1e-05
    %v723 = vrsqrt.pop %v722
    %v724 = vmul.f32 %v721, %v723
    %v725 = vld [vmem:[%s3 + $0x5] sm:$0x1]
    %v726 = vmul.f32 %v691, %v724
    %v727 = vsub.f32 %v725, %v726
    %v728 = vlaneseq
    %v729 = vshrl.u32 %v728, 7
    %v730 = vsub.s32 0, %v729
    %v731 = vrot.slane %v724, %v730
    %v732 = vmul.f32 %v585, %v731
    %v733 = vmul.f32 %v587, %v731
    %v734 = vmul.f32 %v589, %v731
    %v735 = vmul.f32 %v591, %v731
    %v736 = vlaneseq
    %v737 = vshrl.u32 %v736, 7
    %v738 = vsub.s32 0, %v737
    %v739 = vrot.slane %v727, %v738
    %v740 = vadd.f32 %v732, %v739
    %v741 = vadd.f32 %v733, %v739
    %v742 = vadd.f32 %v734, %v739
    %v743 = vadd.f32 %v735, %v739
    %vm744 = vcmask 60416
    %vm745 = vmand %vm744, %vm144
    %v746 = vld [vmem:[#allocation2] sm:$0xf]
    %v747 = vsel %vm745, 0, %v746
    %748 = vst [vmem:[#allocation2] sm:$0xf] %v747
    %vm749 = vcmask 60416
    %750 = vst.msk [vmem:[#allocation2 + $0x8] sm:$0xf] %vm749, 0
    %vm751 = vcmask 57344
    %vm752 = vmand %vm751, %vm88
    %v753 = vld [vmem:[#allocation2 + $0x10] sm:$0x1]
    %v754 = vsel %vm752, 0, %v753
    %755 = vst [vmem:[#allocation2 + $0x10] sm:$0x1] %v754
    %v756 = vld [vmem:[#allocation2 + $0x18] sm:$0xf]
    %v757 = vsel %vm745, 0, %v756
    %758 = vst [vmem:[#allocation2 + $0x18] sm:$0xf] %v757
    %759 = vst.msk [vmem:[#allocation2 + $0x20] sm:$0xf] %vm749, 0
    %v760 = vld [vmem:[#allocation2 + $0x28] sm:$0x1]
    %v761 = vsel %vm752, 0, %v760
    %762 = vst [vmem:[#allocation2 + $0x28] sm:$0x1] %v761
    %v763 = vpack.c.bf16 %v667, %v666
    %v765 = vunpack.c.l.b16 %v763
    %v766 = vunpack.c.h.b16 %v763
    %v767 = vpack.c.b16 %v765, %v765
    %v768 = vpack.c.b16 %v766, %v766
    %v770 = vshrl.u32 %v767, 16
    %v772 = vrot.slane %v770, 7
    %v773 = vshll.u32 %v767, 16
    %v775 = vor.u32 %v772, %v773
    %v776 = vrot.slane %v772, 4
    %v778 = vshrl.u32 %v768, 16
    %v780 = vrot.slane %v778, 7
    %v781 = vshll.u32 %v768, 16
    %v783 = vor.u32 %v780, %v781
    %v784 = vsel %vm90, %v776, %v783
    %v785 = vrot.slane %v780, 4
    %786 = vrot.lane.b32.xlu0 %v775, 8
    %v787 = vpop.permute.xlu0 %786
    %788 = vrot.lane.b32.xlu0 %v784, 8
    %v789 = vpop.permute.xlu0 %788
    %790 = vrot.lane.b32.xlu0 %v785, 8
    %v791 = vpop.permute.xlu0 %790
    %v792 = vrot.slane %v787, 4
    %v793 = vrot.slane %v789, 4
    %v794 = vrot.slane %v791, 4
    %vm795 = vcmask 64512
    %v796 = vsel %vm795, %v792, %v787
    %v797 = vsel %vm795, %v793, %v789
    %v798 = vsel %vm795, %v794, %v791
    %vm802 = vcmask 1043520
    %vm803 = vmand %vm802, %vm144
    %vm804 = vcmask 64516
    %vm805 = vsmask.f32 7954
    %vm806 = vmand %vm804, %vm805
    %vm807 = vmor %vm806, %vm803
    %v808 = vld [vmem:[#allocation2] sm:$0xff]
    %v809 = vsel %vm807, %v796, %v808
    %810 = vst [vmem:[#allocation2] sm:$0xff] %v809
    %vm811 = vcmask 1043520
    %vm812 = vcmask 64516
    %vm813 = vmor %vm812, %vm811
    %814 = vst.msk [vmem:[#allocation2 + $0x8] sm:$0xff] %vm813, %v797
    %vm815 = vcmask 1040448
    %vm816 = vmand %vm815, %vm88
    %vm817 = vcmask 61444
    %vm818 = vsmask.f32 4352
    %vm819 = vmand %vm817, %vm818
    %vm820 = vmor %vm819, %vm816
    %v821 = vld [vmem:[#allocation2 + $0x10] sm:$0x11]
    %v822 = vsel %vm820, %v798, %v821
    %823 = vst [vmem:[#allocation2 + $0x10] sm:$0x11] %v822
    %v824 = vpack.c.bf16 %v669, %v668
    %v826 = vunpack.c.l.b16 %v824
    %v827 = vunpack.c.h.b16 %v824
    %v828 = vpack.c.b16 %v826, %v826
    %v829 = vpack.c.b16 %v827, %v827
    %v831 = vshrl.u32 %v828, 16
    %v833 = vrot.slane %v831, 7
    %v834 = vshll.u32 %v828, 16
    %v836 = vor.u32 %v833, %v834
    %v837 = vrot.slane %v833, 4
    %v839 = vshrl.u32 %v829, 16
    %v841 = vrot.slane %v839, 7
    %v842 = vshll.u32 %v829, 16
    %v844 = vor.u32 %v841, %v842
    %v845 = vsel %vm90, %v837, %v844
    %v846 = vrot.slane %v841, 4
    %847 = vrot.lane.b32.xlu0 %v836, 8
    %v848 = vpop.permute.xlu0 %847
    %849 = vrot.lane.b32.xlu0 %v845, 8
    %v850 = vpop.permute.xlu0 %849
    %851 = vrot.lane.b32.xlu0 %v846, 8
    %v852 = vpop.permute.xlu0 %851
    %v853 = vrot.slane %v848, 4
    %v854 = vrot.slane %v850, 4
    %v855 = vrot.slane %v852, 4
    %v856 = vsel %vm795, %v853, %v848
    %v857 = vsel %vm795, %v854, %v850
    %v858 = vsel %vm795, %v855, %v852
    %v862 = vld [vmem:[%s165] sm:$0xff]
    %v863 = vsel %vm807, %v856, %v862
    %864 = vst [vmem:[%s165] sm:$0xff] %v863
    %865 = vst.msk [vmem:[%s165 + $0x8] sm:$0xff] %vm813, %v857
    %v866 = vld [vmem:[%s165 + $0x10] sm:$0x11]
    %v867 = vsel %vm820, %v858, %v866
    %868 = vst [vmem:[%s165 + $0x10] sm:$0x11] %v867
    %v869 = vld [vmem:[#allocation2] sm:$0xff]
    %v870 = vld [vmem:[#allocation2 + $0x8] sm:$0xff]
    %v871 = vld [vmem:[%s165] sm:$0xff]
    %v872 = vld [vmem:[%s165 + $0x8] sm:$0xff]
    %v875 = vunpack.c.l.b16 %v869
    %v876 = vunpack.c.h.b16 %v869
    %v877 = vunpack.c.l.b16 %v870
    %v878 = vunpack.c.h.b16 %v870
    %v879 = vpack.c.b16 %v877, %v875
    %v880 = vpack.c.b16 %v878, %v876
    %v884 = vunpack.c.l.b16 %v871
    %v885 = vunpack.c.h.b16 %v871
    %v886 = vunpack.c.l.b16 %v872
    %v887 = vunpack.c.h.b16 %v872
    %v888 = vpack.c.b16 %v886, %v884
    %v889 = vpack.c.b16 %v887, %v885
    %v891 = vld [vmem:[#allocation8] sm:$0xf]
    %v892 = vld [vmem:[#allocation8 + $0x4] sm:$0xf]
    %v893 = vld [vmem:[#allocation8 + $0x8] sm:$0xf]
    %v894 = vld [vmem:[#allocation8 + $0xc] sm:$0xf]
    %v895 = vld [vmem:[#allocation8 + $0x10] sm:$0xf]
    %v896 = vld [vmem:[#allocation8 + $0x14] sm:$0xf]
    %v897 = vld [vmem:[#allocation8 + $0x18] sm:$0xf]
    %v898 = vld [vmem:[#allocation8 + $0x1c] sm:$0xf]
    %v899 = vld [vmem:[#allocation8 + $0x20] sm:$0xf]
    %v900 = vld [vmem:[#allocation8 + $0x24] sm:$0xf]
    %v901 = vld [vmem:[#allocation8 + $0x28] sm:$0xf]
    %v902 = vld [vmem:[#allocation8 + $0x2c] sm:$0xf]
    %v903 = vld [vmem:[#allocation8 + $0x30] sm:$0xf]
    %v904 = vld [vmem:[#allocation8 + $0x34] sm:$0xf]
    %v905 = vld [vmem:[#allocation8 + $0x38] sm:$0xf]
    %v906 = vld [vmem:[#allocation8 + $0x3c] sm:$0xf]
    %v907 = vld [vmem:[#allocation8 + $0x40] sm:$0xf]
    %v908 = vld [vmem:[#allocation8 + $0x44] sm:$0xf]
    %v909 = vld [vmem:[#allocation2 + $0x10] sm:$0x11]
    %v910 = vld [vmem:[%s165 + $0x10] sm:$0x11]
    %v912 = vunpack.c.l.b16 %v909
    %v913 = vunpack.c.h.b16 %v909
    %v914 = vpack.c.b16 %v912, %v912
    %v915 = vpack.c.b16 %v913, %v913
    %v917 = vshrl.u32 %v879, 16
    %v919 = vshll.u32 %v879, 16
    %v921 = vrot.slane %v919, 1
    %v922 = vor.u32 %v917, %v921
    %v924 = vshll.u32 %v914, 16
    %v926 = vrot.slane %v924, 1
    %v927 = vsel %vm192, %v922, %v926
    %v929 = vshrl.u32 %v880, 16
    %v931 = vshll.u32 %v880, 16
    %v933 = vrot.slane %v931, 1
    %v934 = vor.u32 %v929, %v933
    %v936 = vshll.u32 %v915, 16
    %v938 = vrot.slane %v936, 1
    %v939 = vsel %vm192, %v934, %v938
    %v942 = vunpack.c.l.b16 %v910
    %v943 = vunpack.c.h.b16 %v910
    %v944 = vpack.c.b16 %v942, %v942
    %v945 = vpack.c.b16 %v943, %v943
    %v947 = vshrl.u32 %v888, 16
    %v949 = vshll.u32 %v888, 16
    %v951 = vrot.slane %v949, 1
    %v952 = vor.u32 %v947, %v951
    %v954 = vshll.u32 %v944, 16
    %v956 = vrot.slane %v954, 1
    %v957 = vsel %vm192, %v952, %v956
    %v959 = vshrl.u32 %v889, 16
    %v961 = vshll.u32 %v889, 16
    %v963 = vrot.slane %v961, 1
    %v964 = vor.u32 %v959, %v963
    %v966 = vshll.u32 %v945, 16
    %v968 = vrot.slane %v966, 1
    %v969 = vsel %vm192, %v964, %v968
    %s971 = scalar_lea.vmem [#allocation8], 72
    %v972 = vld [vmem:[%s971] sm:$0xf]
    %v973 = vld [vmem:[%s971 + $0x4] sm:$0xf]
    %v974 = vld [vmem:[%s971 + $0x8] sm:$0xf]
    %v975 = vld [vmem:[%s971 + $0xc] sm:$0xf]
    %v976 = vld [vmem:[%s971 + $0x10] sm:$0xf]
    %v977 = vld [vmem:[%s971 + $0x14] sm:$0xf]
    %v978 = vld [vmem:[%s971 + $0x18] sm:$0xf]
    %v979 = vld [vmem:[%s971 + $0x1c] sm:$0xf]
    %v980 = vld [vmem:[%s971 + $0x20] sm:$0xf]
    %v981 = vld [vmem:[%s971 + $0x24] sm:$0xf]
    %v982 = vld [vmem:[%s971 + $0x28] sm:$0xf]
    %v983 = vld [vmem:[%s971 + $0x2c] sm:$0xf]
    %v984 = vld [vmem:[%s971 + $0x30] sm:$0xf]
    %v985 = vld [vmem:[%s971 + $0x34] sm:$0xf]
    %v986 = vld [vmem:[%s971 + $0x38] sm:$0xf]
    %v987 = vld [vmem:[%s971 + $0x3c] sm:$0xf]
    %v988 = vld [vmem:[%s971 + $0x40] sm:$0xf]
    %v989 = vld [vmem:[%s971 + $0x44] sm:$0xf]
    %v1008 = vunpack.c.l.b16 %v972
    %v1009 = vunpack.c.l.b16 %v973
    %v1010 = vunpack.c.l.b16 %v974
    %v1011 = vunpack.c.l.b16 %v975
    %v1012 = vunpack.c.l.b16 %v976
    %v1013 = vunpack.c.l.b16 %v977
    %v1014 = vunpack.c.l.b16 %v978
    %v1015 = vunpack.c.l.b16 %v979
    %v1016 = vunpack.c.l.b16 %v980
    %v1017 = vunpack.c.l.b16 %v981
    %v1018 = vunpack.c.l.b16 %v982
    %v1019 = vunpack.c.l.b16 %v983
    %v1020 = vunpack.c.l.b16 %v984
    %v1021 = vunpack.c.l.b16 %v985
    %v1022 = vunpack.c.l.b16 %v986
    %v1023 = vunpack.c.l.b16 %v987
    %v1024 = vunpack.c.l.b16 %v988
    %v1025 = vunpack.c.l.b16 %v989
    %v1026 = vpack.c.b16 %v1009, %v1008
    %v1027 = vpack.c.b16 %v1011, %v1010
    %v1028 = vpack.c.b16 %v1013, %v1012
    %v1029 = vpack.c.b16 %v1015, %v1014
    %v1030 = vpack.c.b16 %v1017, %v1016
    %v1031 = vpack.c.b16 %v1019, %v1018
    %v1032 = vpack.c.b16 %v1021, %v1020
    %v1033 = vpack.c.b16 %v1023, %v1022
    %v1034 = vpack.c.b16 %v1025, %v1024
    %vm1044 = vcmask 130048
    %v1046 = vsel %vm1044, %v939, 0
    %v1049 = vsel %vm1044, %v969, 0
    %1051 = vmatprep.subr.bf16.mxu0 0
    %1052 = vmatpush1.bf16.msra.mxu0 %v1026
    %1053 = vmatprep.subr.bf16.mxu0 0
    %1054 = vmatpush1.bf16.msra.mxu0 %v1027
    %1055 = vmatprep.subr.bf16.mxu0 0
    %1056 = vmatpush1.bf16.msra.mxu0 %v1028
    %1057 = vmatprep.subr.bf16.mxu0 0
    %1058 = vmatpush1.bf16.msra.mxu0 %v1029
    %1059 = vmatprep.subr.bf16.mxu0 0
    %1060 = vmatpush1.bf16.msra.mxu0 %v1030
    %1061 = vmatprep.subr.bf16.mxu0 0
    %1062 = vmatpush1.bf16.msra.mxu0 %v1031
    %1063 = vmatprep.subr.bf16.mxu0 0
    %1064 = vmatpush1.bf16.msra.mxu0 %v1032
    %1065 = vmatprep.subr.bf16.mxu0 0
    %1066 = vmatpush1.bf16.msra.mxu0 %v1033
    %1067 = vmatprep.subr.bf16.mxu0 0
    %1068 = vmatpush1.bf16.msra.mxu0 %v1034
    %1069 = vmatprep.subr.bf16.mxu0 0
    %1070 = vmatpush1.bf16.msra.mxu0 0
    %1071 = vmatprep.subr.bf16.mxu0 0
    %1072 = vmatpush1.bf16.msra.mxu0 0
    %1073 = vmatprep.subr.bf16.mxu0 0
    %1074 = vmatpush1.bf16.msra.mxu0 0
    %1075 = vmatprep.subr.bf16.mxu0 0
    %1076 = vmatpush1.bf16.msra.mxu0 0
    %1077 = vmatprep.subr.bf16.mxu0 0
    %1078 = vmatpush1.bf16.msra.mxu0 0
    %1079 = vmatprep.subr.bf16.mxu0 0
    %1080 = vmatpush1.bf16.msra.mxu0 0
    %1081 = vmatprep.subr.bf16.mxu0 0
    %1082 = vmatpush1.bf16.msra.mxu0 0
    %1083 = vmatprep.mubr.bf16.mxu0 %v1046
    %1084 = vmatmul.mubr.bf16.gmra.mrb[0].mxu0 %v927
    %v1085 = vpop.f32.mrb[0].mxu0
    %v1086 = vadd.f32 0.0, %v1085
    %v1087 = vpop.f32.mrb[0].mxu0
    %v1088 = vpop.f32.mrb[0].mxu0
    %v1089 = vadd.f32 0.0, %v1088
    %v1090 = vpop.f32.mrb[0].mxu0
    %1091 = vmatprep.mubr.bf16.mxu0 %v1049
    %1092 = vmatmul.mubr.bf16.gmra.mrb[0].mxu0 %v957
    %v1093 = vpop.f32.mrb[0].mxu0
    %v1094 = vadd.f32 0.0, %v1093
    %v1095 = vpop.f32.mrb[0].mxu0
    %v1096 = vpop.f32.mrb[0].mxu0
    %v1097 = vadd.f32 0.0, %v1096
    %v1098 = vpop.f32.mrb[0].mxu0
    %1099 = vdwg.mxu0
    %v1118 = vunpack.c.l.b16 %v891
    %v1119 = vunpack.c.l.b16 %v892
    %v1120 = vunpack.c.l.b16 %v893
    %v1121 = vunpack.c.l.b16 %v894
    %v1122 = vunpack.c.l.b16 %v895
    %v1123 = vunpack.c.l.b16 %v896
    %v1124 = vunpack.c.l.b16 %v897
    %v1125 = vunpack.c.l.b16 %v898
    %v1126 = vunpack.c.l.b16 %v899
    %v1127 = vunpack.c.l.b16 %v900
    %v1128 = vunpack.c.l.b16 %v901
    %v1129 = vunpack.c.l.b16 %v902
    %v1130 = vunpack.c.l.b16 %v903
    %v1131 = vunpack.c.l.b16 %v904
    %v1132 = vunpack.c.l.b16 %v905
    %v1133 = vunpack.c.l.b16 %v906
    %v1134 = vunpack.c.l.b16 %v907
    %v1135 = vunpack.c.l.b16 %v908
    %v1136 = vpack.c.b16 %v1119, %v1118
    %v1137 = vpack.c.b16 %v1121, %v1120
    %v1138 = vpack.c.b16 %v1123, %v1122
    %v1139 = vpack.c.b16 %v1125, %v1124
    %v1140 = vpack.c.b16 %v1127, %v1126
    %v1141 = vpack.c.b16 %v1129, %v1128
    %v1142 = vpack.c.b16 %v1131, %v1130
    %v1143 = vpack.c.b16 %v1133, %v1132
    %v1144 = vpack.c.b16 %v1135, %v1134
    %v1154 = vsel %vm1044, %v880, 0
    %v1156 = vsel %vm1044, %v889, 0
    %1158 = vmatprep.subr.bf16.mxu0 0
    %1159 = vmatpush1.bf16.msra.mxu0 %v1136
    %1160 = vmatprep.subr.bf16.mxu0 0
    %1161 = vmatpush1.bf16.msra.mxu0 %v1137
    %1162 = vmatprep.subr.bf16.mxu0 0
    %1163 = vmatpush1.bf16.msra.mxu0 %v1138
    %1164 = vmatprep.subr.bf16.mxu0 0
    %1165 = vmatpush1.bf16.msra.mxu0 %v1139
    %1166 = vmatprep.subr.bf16.mxu0 0
    %1167 = vmatpush1.bf16.msra.mxu0 %v1140
    %1168 = vmatprep.subr.bf16.mxu0 0
    %1169 = vmatpush1.bf16.msra.mxu0 %v1141
    %1170 = vmatprep.subr.bf16.mxu0 0
    %1171 = vmatpush1.bf16.msra.mxu0 %v1142
    %1172 = vmatprep.subr.bf16.mxu0 0
    %1173 = vmatpush1.bf16.msra.mxu0 %v1143
    %1174 = vmatprep.subr.bf16.mxu0 0
    %1175 = vmatpush1.bf16.msra.mxu0 %v1144
    %1176 = vmatprep.subr.bf16.mxu0 0
    %1177 = vmatpush1.bf16.msra.mxu0 0
    %1178 = vmatprep.subr.bf16.mxu0 0
    %1179 = vmatpush1.bf16.msra.mxu0 0
    %1180 = vmatprep.subr.bf16.mxu0 0
    %1181 = vmatpush1.bf16.msra.mxu0 0
    %1182 = vmatprep.subr.bf16.mxu0 0
    %1183 = vmatpush1.bf16.msra.mxu0 0
    %1184 = vmatprep.subr.bf16.mxu0 0
    %1185 = vmatpush1.bf16.msra.mxu0 0
    %1186 = vmatprep.subr.bf16.mxu0 0
    %1187 = vmatpush1.bf16.msra.mxu0 0
    %1188 = vmatprep.subr.bf16.mxu0 0
    %1189 = vmatpush1.bf16.msra.mxu0 0
    %1190 = vmatprep.mubr.bf16.mxu0 %v1154
    %1191 = vmatmul.mubr.bf16.gmra.mrb[0].mxu0 %v879
    %v1192 = vpop.f32.mrb[0].mxu0
    %v1193 = vadd.f32 %v1086, %v1192
    %v1194 = vpop.f32.mrb[0].mxu0
    %v1195 = vpop.f32.mrb[0].mxu0
    %v1196 = vadd.f32 %v1089, %v1195
    %v1197 = vpop.f32.mrb[0].mxu0
    %1198 = vmatprep.mubr.bf16.mxu0 %v1156
    %1199 = vmatmul.mubr.bf16.gmra.mrb[0].mxu0 %v888
    %v1200 = vpop.f32.mrb[0].mxu0
    %v1201 = vadd.f32 %v1094, %v1200
    %v1202 = vpop.f32.mrb[0].mxu0
    %v1203 = vpop.f32.mrb[0].mxu0
    %v1204 = vadd.f32 %v1097, %v1203
    %v1205 = vpop.f32.mrb[0].mxu0
    %1206 = vdwg.mxu0
    %v1207 = vld [vmem:[#allocation2] sm:$0xee]
    %v1208 = vld [vmem:[%s165] sm:$0xee]
    %v1210 = vunpack.c.l.b16 %v1207
    %v1211 = vunpack.c.h.b16 %v1207
    %v1212 = vpack.c.b16 %v877, %v1210
    %v1213 = vpack.c.b16 %v878, %v1211
    %v1214 = vrot.slane %v1212, 1
    %v1215 = vrot.slane %v914, 1
    %v1216 = vsel %vm454, %v1214, %v1215
    %v1217 = vrot.slane %v1213, 1
    %v1218 = vrot.slane %v915, 1
    %v1219 = vsel %vm454, %v1217, %v1218
    %v1222 = vunpack.c.l.b16 %v1208
    %v1223 = vunpack.c.h.b16 %v1208
    %v1224 = vpack.c.b16 %v886, %v1222
    %v1225 = vpack.c.b16 %v887, %v1223
    %v1226 = vrot.slane %v1224, 1
    %v1227 = vrot.slane %v944, 1
    %v1228 = vsel %vm454, %v1226, %v1227
    %v1229 = vrot.slane %v1225, 1
    %v1230 = vrot.slane %v945, 1
    %v1231 = vsel %vm454, %v1229, %v1230
    %s1233 = scalar_lea.vmem [#allocation8], 144
    %v1234 = vld [vmem:[%s1233] sm:$0xf]
    %v1235 = vld [vmem:[%s1233 + $0x4] sm:$0xf]
    %v1236 = vld [vmem:[%s1233 + $0x8] sm:$0xf]
    %v1237 = vld [vmem:[%s1233 + $0xc] sm:$0xf]
    %v1238 = vld [vmem:[%s1233 + $0x10] sm:$0xf]
    %v1239 = vld [vmem:[%s1233 + $0x14] sm:$0xf]
    %v1240 = vld [vmem:[%s1233 + $0x18] sm:$0xf]
    %v1241 = vld [vmem:[%s1233 + $0x1c] sm:$0xf]
    %v1242 = vld [vmem:[%s1233 + $0x20] sm:$0xf]
    %v1243 = vld [vmem:[%s1233 + $0x24] sm:$0xf]
    %v1244 = vld [vmem:[%s1233 + $0x28] sm:$0xf]
    %v1245 = vld [vmem:[%s1233 + $0x2c] sm:$0xf]
    %v1246 = vld [vmem:[%s1233 + $0x30] sm:$0xf]
    %v1247 = vld [vmem:[%s1233 + $0x34] sm:$0xf]
    %v1248 = vld [vmem:[%s1233 + $0x38] sm:$0xf]
    %v1249 = vld [vmem:[%s1233 + $0x3c] sm:$0xf]
    %v1250 = vld [vmem:[%s1233 + $0x40] sm:$0xf]
    %v1251 = vld [vmem:[%s1233 + $0x44] sm:$0xf]
    %v1270 = vunpack.c.l.b16 %v1234
    %v1271 = vunpack.c.l.b16 %v1235
    %v1272 = vunpack.c.l.b16 %v1236
    %v1273 = vunpack.c.l.b16 %v1237
    %v1274 = vunpack.c.l.b16 %v1238
    %v1275 = vunpack.c.l.b16 %v1239
    %v1276 = vunpack.c.l.b16 %v1240
    %v1277 = vunpack.c.l.b16 %v1241
    %v1278 = vunpack.c.l.b16 %v1242
    %v1279 = vunpack.c.l.b16 %v1243
    %v1280 = vunpack.c.l.b16 %v1244
    %v1281 = vunpack.c.l.b16 %v1245
    %v1282 = vunpack.c.l.b16 %v1246
    %v1283 = vunpack.c.l.b16 %v1247
    %v1284 = vunpack.c.l.b16 %v1248
    %v1285 = vunpack.c.l.b16 %v1249
    %v1286 = vunpack.c.l.b16 %v1250
    %v1287 = vunpack.c.l.b16 %v1251
    %v1288 = vpack.c.b16 %v1271, %v1270
    %v1289 = vpack.c.b16 %v1273, %v1272
    %v1290 = vpack.c.b16 %v1275, %v1274
    %v1291 = vpack.c.b16 %v1277, %v1276
    %v1292 = vpack.c.b16 %v1279, %v1278
    %v1293 = vpack.c.b16 %v1281, %v1280
    %v1294 = vpack.c.b16 %v1283, %v1282
    %v1295 = vpack.c.b16 %v1285, %v1284
    %v1296 = vpack.c.b16 %v1287, %v1286
    %v1307 = vsel %vm1044, %v1219, 0
    %v1310 = vsel %vm1044, %v1231, 0
    %1312 = vmatprep.subr.bf16.mxu0 0
    %1313 = vmatpush1.bf16.msra.mxu0 %v1288
    %1314 = vmatprep.subr.bf16.mxu0 0
    %1315 = vmatpush1.bf16.msra.mxu0 %v1289
    %1316 = vmatprep.subr.bf16.mxu0 0
    %1317 = vmatpush1.bf16.msra.mxu0 %v1290
    %1318 = vmatprep.subr.bf16.mxu0 0
    %1319 = vmatpush1.bf16.msra.mxu0 %v1291
    %1320 = vmatprep.subr.bf16.mxu0 0
    %1321 = vmatpush1.bf16.msra.mxu0 %v1292
    %1322 = vmatprep.subr.bf16.mxu0 0
    %1323 = vmatpush1.bf16.msra.mxu0 %v1293
    %1324 = vmatprep.subr.bf16.mxu0 0
    %1325 = vmatpush1.bf16.msra.mxu0 %v1294
    %1326 = vmatprep.subr.bf16.mxu0 0
    %1327 = vmatpush1.bf16.msra.mxu0 %v1295
    %1328 = vmatprep.subr.bf16.mxu0 0
    %1329 = vmatpush1.bf16.msra.mxu0 %v1296
    %1330 = vmatprep.subr.bf16.mxu0 0
    %1331 = vmatpush1.bf16.msra.mxu0 0
    %1332 = vmatprep.subr.bf16.mxu0 0
    %1333 = vmatpush1.bf16.msra.mxu0 0
    %1334 = vmatprep.subr.bf16.mxu0 0
    %1335 = vmatpush1.bf16.msra.mxu0 0
    %1336 = vmatprep.subr.bf16.mxu0 0
    %1337 = vmatpush1.bf16.msra.mxu0 0
    %1338 = vmatprep.subr.bf16.mxu0 0
    %1339 = vmatpush1.bf16.msra.mxu0 0
    %1340 = vmatprep.subr.bf16.mxu0 0
    %1341 = vmatpush1.bf16.msra.mxu0 0
    %1342 = vmatprep.subr.bf16.mxu0 0
    %1343 = vmatpush1.bf16.msra.mxu0 0
    %1344 = vmatprep.mubr.bf16.mxu0 %v1307
    %1345 = vmatmul.mubr.bf16.gmra.mrb[0].mxu0 %v1216
    %v1346 = vpop.f32.mrb[0].mxu0
    %v1347 = vadd.f32 0.0, %v1346
    %v1348 = vpop.f32.mrb[0].mxu0
    %v1349 = vpop.f32.mrb[0].mxu0
    %v1350 = vadd.f32 0.0, %v1349
    %v1351 = vpop.f32.mrb[0].mxu0
    %1352 = vmatprep.mubr.bf16.mxu0 %v1310
    %1353 = vmatmul.mubr.bf16.gmra.mrb[0].mxu0 %v1228
    %v1354 = vpop.f32.mrb[0].mxu0
    %v1355 = vadd.f32 0.0, %v1354
    %v1356 = vpop.f32.mrb[0].mxu0
    %v1357 = vpop.f32.mrb[0].mxu0
    %v1358 = vadd.f32 0.0, %v1357
    %v1359 = vpop.f32.mrb[0].mxu0
    %1360 = vdwg.mxu0
    %v1361 = vadd.f32 %v1193, %v1347
    %v1362 = vadd.f32 %v1196, %v1350
    %v1363 = vadd.f32 %v1201, %v1355
    %v1364 = vadd.f32 %v1204, %v1358
    %v1365 = vadd.f32 %v1361, %v1362
    %v1366 = vadd.f32 %v1365, %v1363
    %v1367 = vadd.f32 %v1366, %v1364
    %v1368 = vrot.slane %v1367, 4
    %v1369 = vadd.f32 %v1367, %v1368
    %v1370 = vrot.slane %v1369, 2
    %v1371 = vadd.f32 %v1369, %v1370
    %v1372 = vrot.slane %v1371, 1
    %v1373 = vadd.f32 %v1371, %v1372
    %1374 = vrot.lane.b32.xlu0 %v1373, 8
    %v1375 = vpop.permute.xlu0 %1374
    %v1376 = vadd.f32 %v1373, %v1375
    %1377 = vrot.lane.b32.xlu0 %v1376, 16
    %v1378 = vpop.permute.xlu0 %1377
    %v1379 = vadd.f32 %v1376, %v1378
    %1380 = vrot.lane.b32.xlu0 %v1379, 32
    %v1381 = vpop.permute.xlu0 %1380
    %v1382 = vadd.f32 %v1379, %v1381
    %1383 = vrot.lane.b32.xlu0 %v1382, 64
    %v1384 = vpop.permute.xlu0 %1383
    %v1385 = vadd.f32 %v1382, %v1384
    %v1386 = vmul.f32 %v1385, 0.001953125
    %v1387 = vmul.f32 %v1361, %v1361
    %v1388 = vmul.f32 %v1362, %v1362
    %v1389 = vmul.f32 %v1363, %v1363
    %v1390 = vmul.f32 %v1364, %v1364
    %v1391 = vadd.f32 %v1387, %v1388
    %v1392 = vadd.f32 %v1391, %v1389
    %v1393 = vadd.f32 %v1392, %v1390
    %v1394 = vrot.slane %v1393, 4
    %v1395 = vadd.f32 %v1393, %v1394
    %v1396 = vrot.slane %v1395, 2
    %v1397 = vadd.f32 %v1395, %v1396
    %v1398 = vrot.slane %v1397, 1
    %v1399 = vadd.f32 %v1397, %v1398
    %1400 = vrot.lane.b32.xlu0 %v1399, 8
    %v1401 = vpop.permute.xlu0 %1400
    %v1402 = vadd.f32 %v1399, %v1401
    %1403 = vrot.lane.b32.xlu0 %v1402, 16
    %v1404 = vpop.permute.xlu0 %1403
    %v1405 = vadd.f32 %v1402, %v1404
    %1406 = vrot.lane.b32.xlu0 %v1405, 32
    %v1407 = vpop.permute.xlu0 %1406
    %v1408 = vadd.f32 %v1405, %v1407
    %1409 = vrot.lane.b32.xlu0 %v1408, 64
    %v1410 = vpop.permute.xlu0 %1409
    %v1411 = vadd.f32 %v1408, %v1410
    %v1412 = vmul.f32 %v1411, 0.001953125
    %v1413 = vmul.f32 %v1386, %v1386
    %v1414 = vsub.f32 %v1412, %v1413
    %v1415 = vmax.f32 %v1414, 0.0
    %v1416 = vld [vmem:[%s3 + $0x2] sm:$0x1]
    %v1417 = vadd.f32 %v1415, 1e-05
    %v1418 = vrsqrt.pop %v1417
    %v1419 = vmul.f32 %v1416, %v1418
    %v1420 = vld [vmem:[%s3 + $0x3] sm:$0x1]
    %v1421 = vmul.f32 %v1386, %v1419
    %v1422 = vsub.f32 %v1420, %v1421
    %v1423 = vlaneseq
    %v1424 = vshrl.u32 %v1423, 7
    %v1425 = vsub.s32 0, %v1424
    %v1426 = vrot.slane %v1419, %v1425
    %v1427 = vmul.f32 %v1361, %v1426
    %v1428 = vmul.f32 %v1362, %v1426
    %v1429 = vmul.f32 %v1363, %v1426
    %v1430 = vmul.f32 %v1364, %v1426
    %v1431 = vlaneseq
    %v1432 = vshrl.u32 %v1431, 7
    %v1433 = vsub.s32 0, %v1432
    %v1434 = vrot.slane %v1422, %v1433
    %v1435 = vadd.f32 %v1427, %v1434
    %v1436 = vadd.f32 %v1428, %v1434
    %v1437 = vadd.f32 %v1429, %v1434
    %v1438 = vadd.f32 %v1430, %v1434
    %v1439 = vadd.f32 %v740, %v1435
    %v1440 = vadd.f32 %v741, %v1436
    %v1441 = vadd.f32 %v742, %v1437
    %v1442 = vadd.f32 %v743, %v1438
    %v1443 = vmax.f32 %v1439, 0.0
    %v1444 = vmax.f32 %v1440, 0.0
    %v1445 = vmax.f32 %v1441, 0.0
    %v1446 = vmax.f32 %v1442, 0.0
    %1447 = vst [vmem:[#allocation9] sm:$0xff] %v1443
    %1448 = vst [vmem:[#allocation9 + $0x8] sm:$0xff] %v1444
    %1449 = vst [vmem:[#allocation9 + $0x10] sm:$0xff] %v1445
    %1450 = vst [vmem:[#allocation9 + $0x18] sm:$0xff] %v1446
    // Predicated region
    $region30: #{tpu_custom_call.1} parent=1 // pred_check
      _
    $region31: #{tpu_custom_call.1} parent=1 // pred_check_branch
      %1452 = sbr.rel (0) target = $region33
    $region32: #{tpu_custom_call.1} parent=1 // pred_region
      %s1454 = ssub.s32 512, 512
      %1455 = vsyncadd [#allocation5], %s1454
      %s1456 = sshll.u32 [#allocation9], 4
      %s1457 = int_to_ptr.vmem [resolvable:$true] %s1456
      %1462 = dma.vmem_to_hbm [thread:$0]  %s1457, 512, %s4, [#allocation5], 128, 128, 8
    $region33: #{tpu_custom_call.1} parent=1 // pred_fallthru
      _
    // Predicated region
    $region34: #{tpu_custom_call.1} parent=1 // pred_check
      _
    $region35: #{tpu_custom_call.1} parent=1 // pred_check_branch
      %1464 = sbr.rel (0) target = $region37
    $region36: #{tpu_custom_call.1} parent=1 // pred_region
      %1465 = dma.done [#allocation5], 512
    $region37: #{tpu_custom_call.1} parent=1 // pred_fallthru
      _
    %1466 = vsyncpa [#allocation4], 1
    %1467 = vsyncpa [#allocation7], 1
    %1468 = vsyncpa [#allocation5], 1

</llo_original>
